<compile_context>
chip_gen: v6e
topology: v6e:2x2x1
jax: 0.10.0
libtpu: 0.0.40
codegen_flags: <defaults>
</compile_context>

<pallas_src>
import math

import jax
import jax.numpy as jnp
from jax.experimental import pallas as pl
from jax.experimental.pallas import tpu as pltpu


def _round_up(n: int, m: int) -> int:
    return ((n + m - 1) // m) * m


def _pack_factor(d: int) -> int:
    """Smallest P (a power of two dividing 128) such that P*d is a multiple of 128."""
    return 128 // math.gcd(128, d)


def _pack_weight(w_vec, pack: int):
    """(D,) weight -> (pack*D, pack) block-diagonal weight.

    Column j holds w in rows [j*D, (j+1)*D), so for a packed input row
    x_packed[r, j*D + d] = x[r*pack + j, d] we get
    (x_packed @ W)[r, j] = sum_d x[r*pack + j, d] * w[d].
    """
    d = w_vec.shape[0]
    eye = jnp.eye(pack, dtype=jnp.float32)                                # (P, P)
    w3 = eye[:, None, :] * w_vec.reshape(1, d, 1).astype(jnp.float32)     # (P, D, P)
    return w3.reshape(pack * d, pack)


def _make_kernel(n_branches: int):
    def kernel(b_ref, *refs):
        # refs = (x_0..x_{n-1}, w_0..w_{n-1}, o_ref)
        x_refs = refs[:n_branches]
        w_refs = refs[n_branches:2 * n_branches]
        o_ref = refs[2 * n_branches]
        # MXU matmuls with f32 accumulation; HIGHEST precision keeps exact
        # Linear(f32) semantics even though the MXU natively multiplies bf16.
        acc = jnp.dot(x_refs[0][...], w_refs[0][...],
                      preferred_element_type=jnp.float32,
                      precision=jax.lax.Precision.HIGHEST)
        for t in range(1, n_branches):
            acc = acc + jnp.dot(x_refs[t][...], w_refs[t][...],
                                preferred_element_type=jnp.float32,
                                precision=jax.lax.Precision.HIGHEST)
        o_ref[...] = (acc + b_ref[0, 0]).astype(o_ref.dtype)
    return kernel


def lr_forward(x_embed=None, x_demo=None, w_embed=None, b_embed=None,
               w_demo=None, b_demo=None, *, block_batch: int = 32768):
    """Pallas equivalent of LR.forward; either branch may be absent (None)."""
    branches = []
    bias = jnp.float32(0.0)
    if x_embed is not None:
        branches.append((x_embed, jnp.reshape(jnp.asarray(w_embed), (-1,))))
        bias = bias + jnp.asarray(b_embed, jnp.float32).reshape(())
    if x_demo is not None:
        branches.append((x_demo, jnp.reshape(jnp.asarray(w_demo), (-1,))))
        bias = bias + jnp.asarray(b_demo, jnp.float32).reshape(())
    if not branches:
        return None

    B = branches[0][0].shape[0]
    out_dtype = jnp.result_type(*[x.dtype for x, _ in branches])

    # Common packing factor across branches (each factor divides 128, so the
    # max is the lcm) -> both packed outputs land on the same (R, P) grid.
    pack = 1
    for x, _ in branches:
        pack = max(pack, _pack_factor(x.shape[1]))

    # Pad the batch only to a multiple of 128 (no-op when already aligned),
    # never to a multiple of the tile.
    b_pad = _round_up(B, 128)
    rows = b_pad // pack

    xs_packed, ws_packed = [], []
    for x, w in branches:
        d = x.shape[1]
        if b_pad != B:
            x = jnp.pad(x, ((0, b_pad - B), (0, 0)))
        xs_packed.append(jnp.reshape(x, (rows, pack * d)))    # free bitcast reshape
        ws_packed.append(_pack_weight(w, pack))

    # ---- tile sizing (VMEM-aware) -----------------------------------------
    in_lanes = sum(x.shape[1] for x in xs_packed)
    # double-buffered f32 bytes per packed row (inputs + lane-padded output)
    row_bytes_db = 2 * 4 * (in_lanes + 128)
    vmem_budget = 20 * 1024 * 1024
    tr_cap = max(8, (vmem_budget // row_bytes_db) // 8 * 8)
    tile_rows = max(8, min(block_batch // pack, tr_cap) // 8 * 8)
    tile_rows = min(tile_rows, rows)
    num_tiles = pl.cdiv(rows, tile_rows)

    wt_bytes = sum(w.shape[0] * 128 * 4 * 2 for w in ws_packed)
    est_vmem = tile_rows * row_bytes_db + wt_bytes
    cp_kwargs = {"dimension_semantics": ("parallel",)}
    if est_vmem > 12 * 1024 * 1024:
        # Raise the scoped VMEM limit explicitly (matters on v5e's 16 MiB default).
        cp_kwargs["vmem_limit_bytes"] = int(min(est_vmem + (8 << 20), 48 << 20))

    in_specs = [pl.BlockSpec(memory_space=pltpu.MemorySpace.SMEM)]    # fused scalar bias
    for x in xs_packed:
        in_specs.append(pl.BlockSpec((tile_rows, x.shape[1]), lambda i: (i, 0)))
    for w in ws_packed:
        in_specs.append(pl.BlockSpec(w.shape, lambda i: (0, 0)))      # resident weights

    out = pl.pallas_call(
        _make_kernel(len(branches)),
        out_shape=jax.ShapeDtypeStruct((rows, pack), out_dtype),
        grid_spec=pltpu.PrefetchScalarGridSpec(
            num_scalar_prefetch=0,
            grid=(num_tiles,),
            in_specs=in_specs,
            out_specs=pl.BlockSpec((tile_rows, pack), lambda i: (i, 0)),
        ),
        compiler_params=pltpu.CompilerParams(**cp_kwargs),
    )(bias.reshape(1, 1), *xs_packed, *ws_packed)

    # (rows, pack) row-major == batch order; back to (B, 1). Reshape is free.
    return out.reshape(b_pad, 1)[:B]


if __name__ == "__main__":
    # Small shapes consistent with the module: batch=2, dim_embed=32, dim_demo=8
    B, dim_embed, dim_demo = 2, 32, 8
    key = jax.random.PRNGKey(0)
    k1, k2, k3, k4, k5, k6 = jax.random.split(key, 6)

    x_embed = jax.random.normal(k1, (B, dim_embed), dtype=jnp.float32)
    x_demo = jax.random.normal(k2, (B, dim_demo), dtype=jnp.float32)

    # Deterministic nn.Linear-style init: U(-1/sqrt(fan_in), 1/sqrt(fan_in))
    bnd_e = 1.0 / (dim_embed ** 0.5)
    bnd_d = 1.0 / (dim_demo ** 0.5)
    w_embed = jax.random.uniform(k3, (1, dim_embed), jnp.float32, -bnd_e, bnd_e)
    b_embed = jax.random.uniform(k4, (1,), jnp.float32, -bnd_e, bnd_e)
    w_demo = jax.random.uniform(k5, (1, dim_demo), jnp.float32, -bnd_d, bnd_d)
    b_demo = jax.random.uniform(k6, (1,), jnp.float32, -bnd_d, bnd_d)

    def ref_lr(xe, xd):
        n = xe.shape[0] if xe is not None else xd.shape[0]
        out = jnp.zeros((n, 1), jnp.float32)
        if xe is not None:
            out = out + (xe * w_embed.reshape(1, -1)).sum(-1, keepdims=True) + b_embed
        if xd is not None:
            out = out + (xd * w_demo.reshape(1, -1)).sum(-1, keepdims=True) + b_demo
        return out

    # 1) tiny batch, both branches
    out = jax.block_until_ready(lr_forward(
        x_embed=x_embed, x_demo=x_demo, w_embed=w_embed, b_embed=b_embed,
        w_demo=w_demo, b_demo=b_demo))
    assert out.shape == (B, 1)
    assert jnp.allclose(out, ref_lr(x_embed, x_demo), atol=2e-5, rtol=2e-5)

    # 2) single-branch paths of the module (dim_demo == 0 / dim_embed == 0)
    out_e = jax.block_until_ready(
        lr_forward(x_embed=x_embed, w_embed=w_embed, b_embed=b_embed))
    assert jnp.allclose(out_e, ref_lr(x_embed, None), atol=2e-5, rtol=2e-5)
    out_d = jax.block_until_ready(
        lr_forward(x_demo=x_demo, w_demo=w_demo, b_demo=b_demo))
    assert jnp.allclose(out_d, ref_lr(None, x_demo), atol=2e-5, rtol=2e-5)

    # 3) larger, non-128-multiple batch with a multi-step grid and a partial
    #    last block (exercises pad-to-128 + pl.cdiv tiling).
    B2 = 5000
    kx, ky = jax.random.split(jax.random.PRNGKey(1))
    x_e2 = jax.random.normal(kx, (B2, dim_embed), dtype=jnp.float32)
    x_d2 = jax.random.normal(ky, (B2, dim_demo), dtype=jnp.float32)
    out2 = jax.block_until_ready(lr_forward(
        x_embed=x_e2, x_demo=x_d2, w_embed=w_embed, b_embed=b_embed,
        w_demo=w_demo, b_demo=b_demo, block_batch=2048))
    assert out2.shape == (B2, 1)
    assert jnp.allclose(out2, ref_lr(x_e2, x_d2), atol=2e-5, rtol=2e-5)

    print("KERNEL_OK")
</pallas_src>

<mosaic_0001>
module attributes {stable_mosaic.version = 11 : i64} {
  func.func @kernel(%arg0: i32, %arg1: memref<1x1xf32, #tpu.memory_space<smem>>, %arg2: memref<8x512xf32, #tpu.memory_space<vmem>>, %arg3: memref<8x128xf32, #tpu.memory_space<vmem>>, %arg4: memref<512x16xf32, #tpu.memory_space<vmem>>, %arg5: memref<128x16xf32, #tpu.memory_space<vmem>>, %arg6: memref<8x16xf32, #tpu.memory_space<vmem>>) attributes {dimension_semantics = [#tpu.dimension_semantics<parallel>], iteration_bounds = array<i64: 1>, scalar_prefetch = 0 : i64, scratch_operands = 0 : i64, tpu.core_type = #tpu.core_type<tc>, window_params = [{transform_indices = @transform_0, window_bounds = array<i64: 1, 1>}, {transform_indices = @transform_1, window_bounds = array<i64: 8, 512>}, {transform_indices = @transform_2, window_bounds = array<i64: 8, 128>}, {pipeline_mode = #tpu.pipeline_mode<synchronous>, transform_indices = @transform_3, window_bounds = array<i64: 512, 16>}, {pipeline_mode = #tpu.pipeline_mode<synchronous>, transform_indices = @transform_4, window_bounds = array<i64: 128, 16>}, {transform_indices = @transform_5, window_bounds = array<i64: 8, 16>}]} {
    %c0 = arith.constant 0 : index
    %c0_0 = arith.constant 0 : index
    %0 = vector.load %arg2[%c0, %c0_0] : memref<8x512xf32, #tpu.memory_space<vmem>>, vector<8x512xf32>
    %c0_1 = arith.constant 0 : index
    %c0_2 = arith.constant 0 : index
    %1 = vector.load %arg4[%c0_1, %c0_2] : memref<512x16xf32, #tpu.memory_space<vmem>>, vector<512x16xf32>
    %cst = arith.constant dense<0.000000e+00> : vector<8x16xf32>
    %2 = tpu.matmul %0, %1, %cst {dimension_numbers = #tpu.dot_dimension_numbers<[1], [0], [0], [1], [0, 0, 1, 1], [], []>, precision = #tpu.contract_precision<fp32>} : vector<8x512xf32>, vector<512x16xf32>, vector<8x16xf32> -> vector<8x16xf32>
    %c0_3 = arith.constant 0 : index
    %c0_4 = arith.constant 0 : index
    %3 = vector.load %arg3[%c0_3, %c0_4] : memref<8x128xf32, #tpu.memory_space<vmem>>, vector<8x128xf32>
    %c0_5 = arith.constant 0 : index
    %c0_6 = arith.constant 0 : index
    %4 = vector.load %arg5[%c0_5, %c0_6] : memref<128x16xf32, #tpu.memory_space<vmem>>, vector<128x16xf32>
    %cst_7 = arith.constant dense<0.000000e+00> : vector<8x16xf32>
    %5 = tpu.matmul %3, %4, %cst_7 {dimension_numbers = #tpu.dot_dimension_numbers<[1], [0], [0], [1], [0, 0, 1, 1], [], []>, precision = #tpu.contract_precision<fp32>} : vector<8x128xf32>, vector<128x16xf32>, vector<8x16xf32> -> vector<8x16xf32>
    %6 = arith.addf %2, %5 : vector<8x16xf32>
    %c0_8 = arith.constant 0 : index
    %c0_9 = arith.constant 0 : index
    %7 = memref.load %arg1[%c0_8, %c0_9] : memref<1x1xf32, #tpu.memory_space<smem>>
    %8 = vector.broadcast %7 : f32 to vector<8x16xf32>
    %9 = arith.addf %6, %8 : vector<8x16xf32>
    %c0_10 = arith.constant 0 : index
    %c0_11 = arith.constant 0 : index
    %10 = vector.load %arg6[%c0_10, %c0_11] : memref<8x16xf32, #tpu.memory_space<vmem>>, vector<8x16xf32>
    tpu.vector_store %arg6[%c0_10, %c0_11], %9 {strides = array<i32>} : memref<8x16xf32, #tpu.memory_space<vmem>>, vector<8x16xf32>,
    return
  }
  func.func @transform_0(%arg0: i32) -> (i32, i32) {
    %c0_i32 = arith.constant 0 : i32
    %c0_i32_0 = arith.constant 0 : i32
    %c0_i32_1 = arith.constant 0 : i32
    return %c0_i32, %c0_i32_0 : i32, i32
  }
  func.func @transform_1(%arg0: i32) -> (i32, i32) {
    %c0_i32 = arith.constant 0 : i32
    %c0_i32_0 = arith.constant 0 : i32
    return %arg0, %c0_i32 : i32, i32
  }
  func.func @transform_2(%arg0: i32) -> (i32, i32) {
    %c0_i32 = arith.constant 0 : i32
    %c0_i32_0 = arith.constant 0 : i32
    return %arg0, %c0_i32 : i32, i32
  }
  func.func @transform_3(%arg0: i32) -> (i32, i32) {
    %c0_i32 = arith.constant 0 : i32
    %c0_i32_0 = arith.constant 0 : i32
    %c0_i32_1 = arith.constant 0 : i32
    return %c0_i32, %c0_i32_0 : i32, i32
  }
  func.func @transform_4(%arg0: i32) -> (i32, i32) {
    %c0_i32 = arith.constant 0 : i32
    %c0_i32_0 = arith.constant 0 : i32
    %c0_i32_1 = arith.constant 0 : i32
    return %c0_i32, %c0_i32_0 : i32, i32
  }
  func.func @transform_5(%arg0: i32) -> (i32, i32) {
    %c0_i32 = arith.constant 0 : i32
    %c0_i32_0 = arith.constant 0 : i32
    return %arg0, %c0_i32 : i32, i32
  }
}

</mosaic_0001>

<llo_original>
// kernel: tpu_custom_call.1
$region0: #{tpu_custom_call.1}
  #allocation0 [shape = 'u32[]', space=smem, size = 0x4, offset = 0x4, fixed_abs, tag = 'smem constant byte address 0x4 - core index']
  #allocation1 [shape = 'u32[144,128]{1,0:T(1,128)}', space=vmem, size = 0x12000, scoped, tag = 'internal scratch']
  #allocation2 [shape = 'f32[1,1]{1,0:T(1,128)S(6)}', space=smem, size = 0x200, scoped, tag = 'scoped memory for tpu_custom_call.1']
  %s0 = inlined_call_operand.<no memory space> [shape: f32[1,1], index: 0, kind: input, shape index: {}]
  %s1 = inlined_call_operand.vmem [shape: f32[8,512], index: 1, kind: input, shape index: {}]
  %s2 = inlined_call_operand.vmem [shape: f32[8,128], index: 2, kind: input, shape index: {}]
  %s3 = inlined_call_operand.vmem [shape: f32[512,16], index: 3, kind: input, shape index: {}]
  %s4 = inlined_call_operand.vmem [shape: f32[128,16], index: 4, kind: input, shape index: {}]
  %s5 = inlined_call_operand.hbm [shape: f32[8,16], index: 5, kind: output, shape index: {}]
  %s6 = sld [smem:[#allocation0]]
  $region30: #{tpu_custom_call.1} parent=0
    _
  %s8 = ssub.s32 1, %s6
  %s9 = scalar_select 0, %s8, %s6
  %10 = sst [smem:[#allocation2]] %s0
  $region1: #{tpu_custom_call.1} parent=0
    #allocation3 [shape = 'u8[4096]{0}', space=vmem, size = 0x1000, scoped, tag = 'output window, operand 0, single buffered']
    #allocation4 [shape = 's32[1]{0}', space=sflag, size = 0x4, scoped, tag = 'scoped memory for tpu_custom_call.1']
    %11 = vsyncpa [#allocation4], 0
    // Predicated region
    $region2: #{tpu_custom_call.1} parent=1 // pred_check
      _
    $region3: #{tpu_custom_call.1} parent=1 // pred_check_branch
      %13 = sbr.rel (0) target = $region5
    $region4: #{tpu_custom_call.1} parent=1 // pred_region
      _
    $region5: #{tpu_custom_call.1} parent=1 // pred_fallthru
      _
    // Predicated region
    $region6: #{tpu_custom_call.1} parent=1 // pred_check
      _
    $region7: #{tpu_custom_call.1} parent=1 // pred_check_branch
      %15 = sbr.rel (0) target = $region9
    $region8: #{tpu_custom_call.1} parent=1 // pred_region
      _
    $region9: #{tpu_custom_call.1} parent=1 // pred_fallthru
      _
    // Predicated region
    $region10: #{tpu_custom_call.1} parent=1 // pred_check
      _
    $region11: #{tpu_custom_call.1} parent=1 // pred_check_branch
      %17 = sbr.rel (0) target = $region13
    $region12: #{tpu_custom_call.1} parent=1 // pred_region
      _
    $region13: #{tpu_custom_call.1} parent=1 // pred_fallthru
      _
    // Predicated region
    $region14: #{tpu_custom_call.1} parent=1 // pred_check
      _
    $region15: #{tpu_custom_call.1} parent=1 // pred_check_branch
      %19 = sbr.rel (0) target = $region17
    $region16: #{tpu_custom_call.1} parent=1 // pred_region
      _
    $region17: #{tpu_custom_call.1} parent=1 // pred_fallthru
      _
    // Predicated region
    $region18: #{tpu_custom_call.1} parent=1 // pred_check
      _
    $region19: #{tpu_custom_call.1} parent=1 // pred_check_branch
      %21 = sbr.rel (0) target = $region21
    $region20: #{tpu_custom_call.1} parent=1 // pred_region
      _
    $region21: #{tpu_custom_call.1} parent=1 // pred_fallthru
      _
    %v22 = vld [vmem:[%s1] sm:$0xff]
    %v23 = vld [vmem:[%s1 + $0x8] sm:$0xff]
    %v24 = vld [vmem:[%s1 + $0x10] sm:$0xff]
    %v25 = vld [vmem:[%s1 + $0x18] sm:$0xff]
    %v26 = vld [vmem:[%s3] sm:$0xff]
    %v27 = vld [vmem:[%s3 + $0x8] sm:$0xff]
    %v28 = vld [vmem:[%s3 + $0x10] sm:$0xff]
    %v29 = vld [vmem:[%s3 + $0x18] sm:$0xff]
    %v30 = vld [vmem:[%s3 + $0x20] sm:$0xff]
    %v31 = vld [vmem:[%s3 + $0x28] sm:$0xff]
    %v32 = vld [vmem:[%s3 + $0x30] sm:$0xff]
    %v33 = vld [vmem:[%s3 + $0x38] sm:$0xff]
    %v34 = vld [vmem:[%s3 + $0x40] sm:$0xff]
    %v35 = vld [vmem:[%s3 + $0x48] sm:$0xff]
    %v36 = vld [vmem:[%s3 + $0x50] sm:$0xff]
    %v37 = vld [vmem:[%s3 + $0x58] sm:$0xff]
    %v38 = vld [vmem:[%s3 + $0x60] sm:$0xff]
    %v39 = vld [vmem:[%s3 + $0x68] sm:$0xff]
    %v40 = vld [vmem:[%s3 + $0x70] sm:$0xff]
    %v41 = vld [vmem:[%s3 + $0x78] sm:$0xff]
    %v42 = vld [vmem:[%s3 + $0x80] sm:$0xff]
    %v43 = vld [vmem:[%s3 + $0x88] sm:$0xff]
    %v44 = vld [vmem:[%s3 + $0x90] sm:$0xff]
    %v45 = vld [vmem:[%s3 + $0x98] sm:$0xff]
    %v46 = vld [vmem:[%s3 + $0xa0] sm:$0xff]
    %v47 = vld [vmem:[%s3 + $0xa8] sm:$0xff]
    %v48 = vld [vmem:[%s3 + $0xb0] sm:$0xff]
    %v49 = vld [vmem:[%s3 + $0xb8] sm:$0xff]
    %v50 = vld [vmem:[%s3 + $0xc0] sm:$0xff]
    %v51 = vld [vmem:[%s3 + $0xc8] sm:$0xff]
    %v52 = vld [vmem:[%s3 + $0xd0] sm:$0xff]
    %v53 = vld [vmem:[%s3 + $0xd8] sm:$0xff]
    %v54 = vld [vmem:[%s3 + $0xe0] sm:$0xff]
    %v55 = vld [vmem:[%s3 + $0xe8] sm:$0xff]
    %v56 = vld [vmem:[%s3 + $0xf0] sm:$0xff]
    %v57 = vld [vmem:[%s3 + $0xf8] sm:$0xff]
    %v58 = vld [vmem:[%s3 + $0x100] sm:$0xff]
    %v59 = vld [vmem:[%s3 + $0x108] sm:$0xff]
    %v60 = vld [vmem:[%s3 + $0x110] sm:$0xff]
    %v61 = vld [vmem:[%s3 + $0x118] sm:$0xff]
    %v62 = vld [vmem:[%s3 + $0x120] sm:$0xff]
    %v63 = vld [vmem:[%s3 + $0x128] sm:$0xff]
    %v64 = vld [vmem:[%s3 + $0x130] sm:$0xff]
    %v65 = vld [vmem:[%s3 + $0x138] sm:$0xff]
    %v66 = vld [vmem:[%s3 + $0x140] sm:$0xff]
    %v67 = vld [vmem:[%s3 + $0x148] sm:$0xff]
    %v68 = vld [vmem:[%s3 + $0x150] sm:$0xff]
    %v69 = vld [vmem:[%s3 + $0x158] sm:$0xff]
    %v70 = vld [vmem:[%s3 + $0x160] sm:$0xff]
    %v71 = vld [vmem:[%s3 + $0x168] sm:$0xff]
    %v72 = vld [vmem:[%s3 + $0x170] sm:$0xff]
    %v73 = vld [vmem:[%s3 + $0x178] sm:$0xff]
    %v74 = vld [vmem:[%s3 + $0x180] sm:$0xff]
    %v75 = vld [vmem:[%s3 + $0x188] sm:$0xff]
    %v76 = vld [vmem:[%s3 + $0x190] sm:$0xff]
    %v77 = vld [vmem:[%s3 + $0x198] sm:$0xff]
    %v78 = vld [vmem:[%s3 + $0x1a0] sm:$0xff]
    %v79 = vld [vmem:[%s3 + $0x1a8] sm:$0xff]
    %v80 = vld [vmem:[%s3 + $0x1b0] sm:$0xff]
    %v81 = vld [vmem:[%s3 + $0x1b8] sm:$0xff]
    %v82 = vld [vmem:[%s3 + $0x1c0] sm:$0xff]
    %v83 = vld [vmem:[%s3 + $0x1c8] sm:$0xff]
    %v84 = vld [vmem:[%s3 + $0x1d0] sm:$0xff]
    %v85 = vld [vmem:[%s3 + $0x1d8] sm:$0xff]
    %v86 = vld [vmem:[%s3 + $0x1e0] sm:$0xff]
    %v87 = vld [vmem:[%s3 + $0x1e8] sm:$0xff]
    %v88 = vld [vmem:[%s3 + $0x1f0] sm:$0xff]
    %v89 = vld [vmem:[%s3 + $0x1f8] sm:$0xff]
    %v90 = vld [vmem:[%s2] sm:$0xff]
    %v91 = vld [vmem:[%s4] sm:$0xff]
    %v92 = vld [vmem:[%s4 + $0x8] sm:$0xff]
    %v93 = vld [vmem:[%s4 + $0x10] sm:$0xff]
    %v94 = vld [vmem:[%s4 + $0x18] sm:$0xff]
    %v95 = vld [vmem:[%s4 + $0x20] sm:$0xff]
    %v96 = vld [vmem:[%s4 + $0x28] sm:$0xff]
    %v97 = vld [vmem:[%s4 + $0x30] sm:$0xff]
    %v98 = vld [vmem:[%s4 + $0x38] sm:$0xff]
    %v99 = vld [vmem:[%s4 + $0x40] sm:$0xff]
    %v100 = vld [vmem:[%s4 + $0x48] sm:$0xff]
    %v101 = vld [vmem:[%s4 + $0x50] sm:$0xff]
    %v102 = vld [vmem:[%s4 + $0x58] sm:$0xff]
    %v103 = vld [vmem:[%s4 + $0x60] sm:$0xff]
    %v104 = vld [vmem:[%s4 + $0x68] sm:$0xff]
    %v105 = vld [vmem:[%s4 + $0x70] sm:$0xff]
    %v106 = vld [vmem:[%s4 + $0x78] sm:$0xff]
    %107 = vmatprep.subr.mxu0 0.0
    %v108 = vand.u32 %v106, 4294901760
    %109 = vmatpush1.msra.mxu0 %v108
    %110 = vmatprep.subr.mxu0 0.0
    %v111 = vand.u32 %v105, 4294901760
    %112 = vmatpush1.msra.mxu0 %v111
    %113 = vmatprep.subr.mxu0 0.0
    %v114 = vand.u32 %v104, 4294901760
    %115 = vmatpush1.msra.mxu0 %v114
    %116 = vmatprep.subr.mxu0 0.0
    %v117 = vand.u32 %v103, 4294901760
    %118 = vmatpush1.msra.mxu0 %v117
    %119 = vmatprep.subr.mxu0 0.0
    %v120 = vand.u32 %v102, 4294901760
    %121 = vmatpush1.msra.mxu0 %v120
    %122 = vmatprep.subr.mxu0 0.0
    %v123 = vand.u32 %v101, 4294901760
    %124 = vmatpush1.msra.mxu0 %v123
    %125 = vmatprep.subr.mxu0 0.0
    %v126 = vand.u32 %v100, 4294901760
    %127 = vmatpush1.msra.mxu0 %v126
    %128 = vmatprep.subr.mxu0 0.0
    %v129 = vand.u32 %v99, 4294901760
    %130 = vmatpush1.msra.mxu0 %v129
    %131 = vmatprep.subr.mxu0 0.0
    %v132 = vand.u32 %v98, 4294901760
    %133 = vmatpush1.msra.mxu0 %v132
    %134 = vmatprep.subr.mxu0 0.0
    %v135 = vand.u32 %v97, 4294901760
    %136 = vmatpush1.msra.mxu0 %v135
    %137 = vmatprep.subr.mxu0 0.0
    %v138 = vand.u32 %v96, 4294901760
    %139 = vmatpush1.msra.mxu0 %v138
    %140 = vmatprep.subr.mxu0 0.0
    %v141 = vand.u32 %v95, 4294901760
    %142 = vmatpush1.msra.mxu0 %v141
    %143 = vmatprep.subr.mxu0 0.0
    %v144 = vand.u32 %v94, 4294901760
    %145 = vmatpush1.msra.mxu0 %v144
    %146 = vmatprep.subr.mxu0 0.0
    %v147 = vand.u32 %v93, 4294901760
    %148 = vmatpush1.msra.mxu0 %v147
    %149 = vmatprep.subr.mxu0 0.0
    %v150 = vand.u32 %v92, 4294901760
    %151 = vmatpush1.msra.mxu0 %v150
    %152 = vmatprep.subr.mxu0 0.0
    %v153 = vand.u32 %v91, 4294901760
    %154 = vmatpush1.msra.mxu0 %v153
    %155 = vmatprep.subr.mxu0 0.0
    %156 = vmatpush2.msra.mxu0 0.0
    %157 = vmatprep.subr.mxu0 0.0
    %158 = vmatpush2.msra.mxu0 0.0
    %159 = vmatprep.subr.mxu0 0.0
    %160 = vmatpush2.msra.mxu0 0.0
    %161 = vmatprep.subr.mxu0 0.0
    %162 = vmatpush2.msra.mxu0 0.0
    %163 = vmatprep.subr.mxu0 0.0
    %164 = vmatpush2.msra.mxu0 0.0
    %165 = vmatprep.subr.mxu0 0.0
    %166 = vmatpush2.msra.mxu0 0.0
    %167 = vmatprep.subr.mxu0 0.0
    %168 = vmatpush2.msra.mxu0 0.0
    %169 = vmatprep.subr.mxu0 0.0
    %170 = vmatpush2.msra.mxu0 0.0
    %171 = vmatprep.subr.mxu0 0.0
    %172 = vmatpush2.msra.mxu0 0.0
    %173 = vmatprep.subr.mxu0 0.0
    %174 = vmatpush2.msra.mxu0 0.0
    %175 = vmatprep.subr.mxu0 0.0
    %176 = vmatpush2.msra.mxu0 0.0
    %177 = vmatprep.subr.mxu0 0.0
    %178 = vmatpush2.msra.mxu0 0.0
    %179 = vmatprep.subr.mxu0 0.0
    %180 = vmatpush2.msra.mxu0 0.0
    %181 = vmatprep.subr.mxu0 0.0
    %182 = vmatpush2.msra.mxu0 0.0
    %183 = vmatprep.subr.mxu0 0.0
    %184 = vmatpush2.msra.mxu0 0.0
    %185 = vmatprep.subr.mxu0 0.0
    %186 = vmatpush2.msra.mxu0 0.0
    %187 = vmatprep.mubr.f32.mxu0 0.0
    %v188 = vand.u32 %v90, 4294901760
    %v189 = vsub.f32 %v90, %v188
    %v190 = vand.u32 %v189, 4294901760
    %v191 = vsub.f32 %v189, %v190
    %v192 = vand.u32 %v191, 4294901760
    %193 = vmatmul.mubr.f32.gmra.mxu0 %v192
    %v194 = vpop.f32.mrf.mxu0
    %v195 = vadd.f32 0.0, %v194
    %v196 = vpop.f32.mrf.mxu0
    %197 = vdwg.mxu0
    %198 = vmatprep.subr.mxu0 0.0
    %v199 = vand.u32 %v106, 4294901760
    %v200 = vsub.f32 %v106, %v199
    %v201 = vand.u32 %v200, 4294901760
    %v202 = vsub.f32 %v200, %v201
    %v203 = vand.u32 %v202, 4294901760
    %204 = vmatpush1.msra.mxu0 %v203
    %205 = vmatprep.subr.mxu0 0.0
    %v206 = vand.u32 %v105, 4294901760
    %v207 = vsub.f32 %v105, %v206
    %v208 = vand.u32 %v207, 4294901760
    %v209 = vsub.f32 %v207, %v208
    %v210 = vand.u32 %v209, 4294901760
    %211 = vmatpush1.msra.mxu0 %v210
    %212 = vmatprep.subr.mxu0 0.0
    %v213 = vand.u32 %v104, 4294901760
    %v214 = vsub.f32 %v104, %v213
    %v215 = vand.u32 %v214, 4294901760
    %v216 = vsub.f32 %v214, %v215
    %v217 = vand.u32 %v216, 4294901760
    %218 = vmatpush1.msra.mxu0 %v217
    %219 = vmatprep.subr.mxu0 0.0
    %v220 = vand.u32 %v103, 4294901760
    %v221 = vsub.f32 %v103, %v220
    %v222 = vand.u32 %v221, 4294901760
    %v223 = vsub.f32 %v221, %v222
    %v224 = vand.u32 %v223, 4294901760
    %225 = vmatpush1.msra.mxu0 %v224
    %226 = vmatprep.subr.mxu0 0.0
    %v227 = vand.u32 %v102, 4294901760
    %v228 = vsub.f32 %v102, %v227
    %v229 = vand.u32 %v228, 4294901760
    %v230 = vsub.f32 %v228, %v229
    %v231 = vand.u32 %v230, 4294901760
    %232 = vmatpush1.msra.mxu0 %v231
    %233 = vmatprep.subr.mxu0 0.0
    %v234 = vand.u32 %v101, 4294901760
    %v235 = vsub.f32 %v101, %v234
    %v236 = vand.u32 %v235, 4294901760
    %v237 = vsub.f32 %v235, %v236
    %v238 = vand.u32 %v237, 4294901760
    %239 = vmatpush1.msra.mxu0 %v238
    %240 = vmatprep.subr.mxu0 0.0
    %v241 = vand.u32 %v100, 4294901760
    %v242 = vsub.f32 %v100, %v241
    %v243 = vand.u32 %v242, 4294901760
    %v244 = vsub.f32 %v242, %v243
    %v245 = vand.u32 %v244, 4294901760
    %246 = vmatpush1.msra.mxu0 %v245
    %247 = vmatprep.subr.mxu0 0.0
    %v248 = vand.u32 %v99, 4294901760
    %v249 = vsub.f32 %v99, %v248
    %v250 = vand.u32 %v249, 4294901760
    %v251 = vsub.f32 %v249, %v250
    %v252 = vand.u32 %v251, 4294901760
    %253 = vmatpush1.msra.mxu0 %v252
    %254 = vmatprep.subr.mxu0 0.0
    %v255 = vand.u32 %v98, 4294901760
    %v256 = vsub.f32 %v98, %v255
    %v257 = vand.u32 %v256, 4294901760
    %v258 = vsub.f32 %v256, %v257
    %v259 = vand.u32 %v258, 4294901760
    %260 = vmatpush1.msra.mxu0 %v259
    %261 = vmatprep.subr.mxu0 0.0
    %v262 = vand.u32 %v97, 4294901760
    %v263 = vsub.f32 %v97, %v262
    %v264 = vand.u32 %v263, 4294901760
    %v265 = vsub.f32 %v263, %v264
    %v266 = vand.u32 %v265, 4294901760
    %267 = vmatpush1.msra.mxu0 %v266
    %268 = vmatprep.subr.mxu0 0.0
    %v269 = vand.u32 %v96, 4294901760
    %v270 = vsub.f32 %v96, %v269
    %v271 = vand.u32 %v270, 4294901760
    %v272 = vsub.f32 %v270, %v271
    %v273 = vand.u32 %v272, 4294901760
    %274 = vmatpush1.msra.mxu0 %v273
    %275 = vmatprep.subr.mxu0 0.0
    %v276 = vand.u32 %v95, 4294901760
    %v277 = vsub.f32 %v95, %v276
    %v278 = vand.u32 %v277, 4294901760
    %v279 = vsub.f32 %v277, %v278
    %v280 = vand.u32 %v279, 4294901760
    %281 = vmatpush1.msra.mxu0 %v280
    %282 = vmatprep.subr.mxu0 0.0
    %v283 = vand.u32 %v94, 4294901760
    %v284 = vsub.f32 %v94, %v283
    %v285 = vand.u32 %v284, 4294901760
    %v286 = vsub.f32 %v284, %v285
    %v287 = vand.u32 %v286, 4294901760
    %288 = vmatpush1.msra.mxu0 %v287
    %289 = vmatprep.subr.mxu0 0.0
    %v290 = vand.u32 %v93, 4294901760
    %v291 = vsub.f32 %v93, %v290
    %v292 = vand.u32 %v291, 4294901760
    %v293 = vsub.f32 %v291, %v292
    %v294 = vand.u32 %v293, 4294901760
    %295 = vmatpush1.msra.mxu0 %v294
    %296 = vmatprep.subr.mxu0 0.0
    %v297 = vand.u32 %v92, 4294901760
    %v298 = vsub.f32 %v92, %v297
    %v299 = vand.u32 %v298, 4294901760
    %v300 = vsub.f32 %v298, %v299
    %v301 = vand.u32 %v300, 4294901760
    %302 = vmatpush1.msra.mxu0 %v301
    %303 = vmatprep.subr.mxu0 0.0
    %v304 = vand.u32 %v91, 4294901760
    %v305 = vsub.f32 %v91, %v304
    %v306 = vand.u32 %v305, 4294901760
    %v307 = vsub.f32 %v305, %v306
    %v308 = vand.u32 %v307, 4294901760
    %309 = vmatpush1.msra.mxu0 %v308
    %310 = vmatprep.subr.mxu0 0.0
    %311 = vmatpush2.msra.mxu0 0.0
    %312 = vmatprep.subr.mxu0 0.0
    %313 = vmatpush2.msra.mxu0 0.0
    %314 = vmatprep.subr.mxu0 0.0
    %315 = vmatpush2.msra.mxu0 0.0
    %316 = vmatprep.subr.mxu0 0.0
    %317 = vmatpush2.msra.mxu0 0.0
    %318 = vmatprep.subr.mxu0 0.0
    %319 = vmatpush2.msra.mxu0 0.0
    %320 = vmatprep.subr.mxu0 0.0
    %321 = vmatpush2.msra.mxu0 0.0
    %322 = vmatprep.subr.mxu0 0.0
    %323 = vmatpush2.msra.mxu0 0.0
    %324 = vmatprep.subr.mxu0 0.0
    %325 = vmatpush2.msra.mxu0 0.0
    %326 = vmatprep.subr.mxu0 0.0
    %327 = vmatpush2.msra.mxu0 0.0
    %328 = vmatprep.subr.mxu0 0.0
    %329 = vmatpush2.msra.mxu0 0.0
    %330 = vmatprep.subr.mxu0 0.0
    %331 = vmatpush2.msra.mxu0 0.0
    %332 = vmatprep.subr.mxu0 0.0
    %333 = vmatpush2.msra.mxu0 0.0
    %334 = vmatprep.subr.mxu0 0.0
    %335 = vmatpush2.msra.mxu0 0.0
    %336 = vmatprep.subr.mxu0 0.0
    %337 = vmatpush2.msra.mxu0 0.0
    %338 = vmatprep.subr.mxu0 0.0
    %339 = vmatpush2.msra.mxu0 0.0
    %340 = vmatprep.subr.mxu0 0.0
    %341 = vmatpush2.msra.mxu0 0.0
    %342 = vmatprep.mubr.f32.mxu0 0.0
    %v343 = vand.u32 %v90, 4294901760
    %344 = vmatmul.mubr.f32.gmra.mxu0 %v343
    %v345 = vpop.f32.mrf.mxu0
    %v346 = vadd.f32 %v195, %v345
    %v347 = vpop.f32.mrf.mxu0
    %348 = vdwg.mxu0
    %349 = vmatprep.subr.mxu0 0.0
    %v350 = vand.u32 %v106, 4294901760
    %v351 = vsub.f32 %v106, %v350
    %352 = vmatpush1.msra.mxu0 %v351
    %353 = vmatprep.subr.mxu0 0.0
    %v354 = vand.u32 %v105, 4294901760
    %v355 = vsub.f32 %v105, %v354
    %356 = vmatpush1.msra.mxu0 %v355
    %357 = vmatprep.subr.mxu0 0.0
    %v358 = vand.u32 %v104, 4294901760
    %v359 = vsub.f32 %v104, %v358
    %360 = vmatpush1.msra.mxu0 %v359
    %361 = vmatprep.subr.mxu0 0.0
    %v362 = vand.u32 %v103, 4294901760
    %v363 = vsub.f32 %v103, %v362
    %364 = vmatpush1.msra.mxu0 %v363
    %365 = vmatprep.subr.mxu0 0.0
    %v366 = vand.u32 %v102, 4294901760
    %v367 = vsub.f32 %v102, %v366
    %368 = vmatpush1.msra.mxu0 %v367
    %369 = vmatprep.subr.mxu0 0.0
    %v370 = vand.u32 %v101, 4294901760
    %v371 = vsub.f32 %v101, %v370
    %372 = vmatpush1.msra.mxu0 %v371
    %373 = vmatprep.subr.mxu0 0.0
    %v374 = vand.u32 %v100, 4294901760
    %v375 = vsub.f32 %v100, %v374
    %376 = vmatpush1.msra.mxu0 %v375
    %377 = vmatprep.subr.mxu0 0.0
    %v378 = vand.u32 %v99, 4294901760
    %v379 = vsub.f32 %v99, %v378
    %380 = vmatpush1.msra.mxu0 %v379
    %381 = vmatprep.subr.mxu0 0.0
    %v382 = vand.u32 %v98, 4294901760
    %v383 = vsub.f32 %v98, %v382
    %384 = vmatpush1.msra.mxu0 %v383
    %385 = vmatprep.subr.mxu0 0.0
    %v386 = vand.u32 %v97, 4294901760
    %v387 = vsub.f32 %v97, %v386
    %388 = vmatpush1.msra.mxu0 %v387
    %389 = vmatprep.subr.mxu0 0.0
    %v390 = vand.u32 %v96, 4294901760
    %v391 = vsub.f32 %v96, %v390
    %392 = vmatpush1.msra.mxu0 %v391
    %393 = vmatprep.subr.mxu0 0.0
    %v394 = vand.u32 %v95, 4294901760
    %v395 = vsub.f32 %v95, %v394
    %396 = vmatpush1.msra.mxu0 %v395
    %397 = vmatprep.subr.mxu0 0.0
    %v398 = vand.u32 %v94, 4294901760
    %v399 = vsub.f32 %v94, %v398
    %400 = vmatpush1.msra.mxu0 %v399
    %401 = vmatprep.subr.mxu0 0.0
    %v402 = vand.u32 %v93, 4294901760
    %v403 = vsub.f32 %v93, %v402
    %404 = vmatpush1.msra.mxu0 %v403
    %405 = vmatprep.subr.mxu0 0.0
    %v406 = vand.u32 %v92, 4294901760
    %v407 = vsub.f32 %v92, %v406
    %408 = vmatpush1.msra.mxu0 %v407
    %409 = vmatprep.subr.mxu0 0.0
    %v410 = vand.u32 %v91, 4294901760
    %v411 = vsub.f32 %v91, %v410
    %412 = vmatpush1.msra.mxu0 %v411
    %413 = vmatprep.subr.mxu0 0.0
    %414 = vmatpush2.msra.mxu0 0.0
    %415 = vmatprep.subr.mxu0 0.0
    %416 = vmatpush2.msra.mxu0 0.0
    %417 = vmatprep.subr.mxu0 0.0
    %418 = vmatpush2.msra.mxu0 0.0
    %419 = vmatprep.subr.mxu0 0.0
    %420 = vmatpush2.msra.mxu0 0.0
    %421 = vmatprep.subr.mxu0 0.0
    %422 = vmatpush2.msra.mxu0 0.0
    %423 = vmatprep.subr.mxu0 0.0
    %424 = vmatpush2.msra.mxu0 0.0
    %425 = vmatprep.subr.mxu0 0.0
    %426 = vmatpush2.msra.mxu0 0.0
    %427 = vmatprep.subr.mxu0 0.0
    %428 = vmatpush2.msra.mxu0 0.0
    %429 = vmatprep.subr.mxu0 0.0
    %430 = vmatpush2.msra.mxu0 0.0
    %431 = vmatprep.subr.mxu0 0.0
    %432 = vmatpush2.msra.mxu0 0.0
    %433 = vmatprep.subr.mxu0 0.0
    %434 = vmatpush2.msra.mxu0 0.0
    %435 = vmatprep.subr.mxu0 0.0
    %436 = vmatpush2.msra.mxu0 0.0
    %437 = vmatprep.subr.mxu0 0.0
    %438 = vmatpush2.msra.mxu0 0.0
    %439 = vmatprep.subr.mxu0 0.0
    %440 = vmatpush2.msra.mxu0 0.0
    %441 = vmatprep.subr.mxu0 0.0
    %442 = vmatpush2.msra.mxu0 0.0
    %443 = vmatprep.subr.mxu0 0.0
    %444 = vmatpush2.msra.mxu0 0.0
    %445 = vmatprep.mubr.f32.mxu0 0.0
    %v446 = vand.u32 %v90, 4294901760
    %v447 = vsub.f32 %v90, %v446
    %448 = vmatmul.mubr.f32.gmra.mxu0 %v447
    %v449 = vpop.f32.mrf.mxu0
    %v450 = vadd.f32 %v346, %v449
    %v451 = vpop.f32.mrf.mxu0
    %452 = vdwg.mxu0
    %453 = vmatprep.subr.mxu0 0.0
    %v454 = vand.u32 %v106, 4294901760
    %455 = vmatpush1.msra.mxu0 %v454
    %456 = vmatprep.subr.mxu0 0.0
    %v457 = vand.u32 %v105, 4294901760
    %458 = vmatpush1.msra.mxu0 %v457
    %459 = vmatprep.subr.mxu0 0.0
    %v460 = vand.u32 %v104, 4294901760
    %461 = vmatpush1.msra.mxu0 %v460
    %462 = vmatprep.subr.mxu0 0.0
    %v463 = vand.u32 %v103, 4294901760
    %464 = vmatpush1.msra.mxu0 %v463
    %465 = vmatprep.subr.mxu0 0.0
    %v466 = vand.u32 %v102, 4294901760
    %467 = vmatpush1.msra.mxu0 %v466
    %468 = vmatprep.subr.mxu0 0.0
    %v469 = vand.u32 %v101, 4294901760
    %470 = vmatpush1.msra.mxu0 %v469
    %471 = vmatprep.subr.mxu0 0.0
    %v472 = vand.u32 %v100, 4294901760
    %473 = vmatpush1.msra.mxu0 %v472
    %474 = vmatprep.subr.mxu0 0.0
    %v475 = vand.u32 %v99, 4294901760
    %476 = vmatpush1.msra.mxu0 %v475
    %477 = vmatprep.subr.mxu0 0.0
    %v478 = vand.u32 %v98, 4294901760
    %479 = vmatpush1.msra.mxu0 %v478
    %480 = vmatprep.subr.mxu0 0.0
    %v481 = vand.u32 %v97, 4294901760
    %482 = vmatpush1.msra.mxu0 %v481
    %483 = vmatprep.subr.mxu0 0.0
    %v484 = vand.u32 %v96, 4294901760
    %485 = vmatpush1.msra.mxu0 %v484
    %486 = vmatprep.subr.mxu0 0.0
    %v487 = vand.u32 %v95, 4294901760
    %488 = vmatpush1.msra.mxu0 %v487
    %489 = vmatprep.subr.mxu0 0.0
    %v490 = vand.u32 %v94, 4294901760
    %491 = vmatpush1.msra.mxu0 %v490
    %492 = vmatprep.subr.mxu0 0.0
    %v493 = vand.u32 %v93, 4294901760
    %494 = vmatpush1.msra.mxu0 %v493
    %495 = vmatprep.subr.mxu0 0.0
    %v496 = vand.u32 %v92, 4294901760
    %497 = vmatpush1.msra.mxu0 %v496
    %498 = vmatprep.subr.mxu0 0.0
    %v499 = vand.u32 %v91, 4294901760
    %500 = vmatpush1.msra.mxu0 %v499
    %501 = vmatprep.subr.mxu0 0.0
    %502 = vmatpush2.msra.mxu0 0.0
    %503 = vmatprep.subr.mxu0 0.0
    %504 = vmatpush2.msra.mxu0 0.0
    %505 = vmatprep.subr.mxu0 0.0
    %506 = vmatpush2.msra.mxu0 0.0
    %507 = vmatprep.subr.mxu0 0.0
    %508 = vmatpush2.msra.mxu0 0.0
    %509 = vmatprep.subr.mxu0 0.0
    %510 = vmatpush2.msra.mxu0 0.0
    %511 = vmatprep.subr.mxu0 0.0
    %512 = vmatpush2.msra.mxu0 0.0
    %513 = vmatprep.subr.mxu0 0.0
    %514 = vmatpush2.msra.mxu0 0.0
    %515 = vmatprep.subr.mxu0 0.0
    %516 = vmatpush2.msra.mxu0 0.0
    %517 = vmatprep.subr.mxu0 0.0
    %518 = vmatpush2.msra.mxu0 0.0
    %519 = vmatprep.subr.mxu0 0.0
    %520 = vmatpush2.msra.mxu0 0.0
    %521 = vmatprep.subr.mxu0 0.0
    %522 = vmatpush2.msra.mxu0 0.0
    %523 = vmatprep.subr.mxu0 0.0
    %524 = vmatpush2.msra.mxu0 0.0
    %525 = vmatprep.subr.mxu0 0.0
    %526 = vmatpush2.msra.mxu0 0.0
    %527 = vmatprep.subr.mxu0 0.0
    %528 = vmatpush2.msra.mxu0 0.0
    %529 = vmatprep.subr.mxu0 0.0
    %530 = vmatpush2.msra.mxu0 0.0
    %531 = vmatprep.subr.mxu0 0.0
    %532 = vmatpush2.msra.mxu0 0.0
    %533 = vmatprep.mubr.f32.mxu0 0.0
    %v534 = vand.u32 %v90, 4294901760
    %v535 = vsub.f32 %v90, %v534
    %v536 = vand.u32 %v535, 4294901760
    %537 = vmatmul.mubr.f32.gmra.mxu0 %v536
    %v538 = vpop.f32.mrf.mxu0
    %v539 = vadd.f32 %v450, %v538
    %v540 = vpop.f32.mrf.mxu0
    %541 = vdwg.mxu0
    %542 = vmatprep.subr.mxu0 0.0
    %v543 = vand.u32 %v106, 4294901760
    %v544 = vsub.f32 %v106, %v543
    %v545 = vand.u32 %v544, 4294901760
    %546 = vmatpush1.msra.mxu0 %v545
    %547 = vmatprep.subr.mxu0 0.0
    %v548 = vand.u32 %v105, 4294901760
    %v549 = vsub.f32 %v105, %v548
    %v550 = vand.u32 %v549, 4294901760
    %551 = vmatpush1.msra.mxu0 %v550
    %552 = vmatprep.subr.mxu0 0.0
    %v553 = vand.u32 %v104, 4294901760
    %v554 = vsub.f32 %v104, %v553
    %v555 = vand.u32 %v554, 4294901760
    %556 = vmatpush1.msra.mxu0 %v555
    %557 = vmatprep.subr.mxu0 0.0
    %v558 = vand.u32 %v103, 4294901760
    %v559 = vsub.f32 %v103, %v558
    %v560 = vand.u32 %v559, 4294901760
    %561 = vmatpush1.msra.mxu0 %v560
    %562 = vmatprep.subr.mxu0 0.0
    %v563 = vand.u32 %v102, 4294901760
    %v564 = vsub.f32 %v102, %v563
    %v565 = vand.u32 %v564, 4294901760
    %566 = vmatpush1.msra.mxu0 %v565
    %567 = vmatprep.subr.mxu0 0.0
    %v568 = vand.u32 %v101, 4294901760
    %v569 = vsub.f32 %v101, %v568
    %v570 = vand.u32 %v569, 4294901760
    %571 = vmatpush1.msra.mxu0 %v570
    %572 = vmatprep.subr.mxu0 0.0
    %v573 = vand.u32 %v100, 4294901760
    %v574 = vsub.f32 %v100, %v573
    %v575 = vand.u32 %v574, 4294901760
    %576 = vmatpush1.msra.mxu0 %v575
    %577 = vmatprep.subr.mxu0 0.0
    %v578 = vand.u32 %v99, 4294901760
    %v579 = vsub.f32 %v99, %v578
    %v580 = vand.u32 %v579, 4294901760
    %581 = vmatpush1.msra.mxu0 %v580
    %582 = vmatprep.subr.mxu0 0.0
    %v583 = vand.u32 %v98, 4294901760
    %v584 = vsub.f32 %v98, %v583
    %v585 = vand.u32 %v584, 4294901760
    %586 = vmatpush1.msra.mxu0 %v585
    %587 = vmatprep.subr.mxu0 0.0
    %v588 = vand.u32 %v97, 4294901760
    %v589 = vsub.f32 %v97, %v588
    %v590 = vand.u32 %v589, 4294901760
    %591 = vmatpush1.msra.mxu0 %v590
    %592 = vmatprep.subr.mxu0 0.0
    %v593 = vand.u32 %v96, 4294901760
    %v594 = vsub.f32 %v96, %v593
    %v595 = vand.u32 %v594, 4294901760
    %596 = vmatpush1.msra.mxu0 %v595
    %597 = vmatprep.subr.mxu0 0.0
    %v598 = vand.u32 %v95, 4294901760
    %v599 = vsub.f32 %v95, %v598
    %v600 = vand.u32 %v599, 4294901760
    %601 = vmatpush1.msra.mxu0 %v600
    %602 = vmatprep.subr.mxu0 0.0
    %v603 = vand.u32 %v94, 4294901760
    %v604 = vsub.f32 %v94, %v603
    %v605 = vand.u32 %v604, 4294901760
    %606 = vmatpush1.msra.mxu0 %v605
    %607 = vmatprep.subr.mxu0 0.0
    %v608 = vand.u32 %v93, 4294901760
    %v609 = vsub.f32 %v93, %v608
    %v610 = vand.u32 %v609, 4294901760
    %611 = vmatpush1.msra.mxu0 %v610
    %612 = vmatprep.subr.mxu0 0.0
    %v613 = vand.u32 %v92, 4294901760
    %v614 = vsub.f32 %v92, %v613
    %v615 = vand.u32 %v614, 4294901760
    %616 = vmatpush1.msra.mxu0 %v615
    %617 = vmatprep.subr.mxu0 0.0
    %v618 = vand.u32 %v91, 4294901760
    %v619 = vsub.f32 %v91, %v618
    %v620 = vand.u32 %v619, 4294901760
    %621 = vmatpush1.msra.mxu0 %v620
    %622 = vmatprep.subr.mxu0 0.0
    %623 = vmatpush2.msra.mxu0 0.0
    %624 = vmatprep.subr.mxu0 0.0
    %625 = vmatpush2.msra.mxu0 0.0
    %626 = vmatprep.subr.mxu0 0.0
    %627 = vmatpush2.msra.mxu0 0.0
    %628 = vmatprep.subr.mxu0 0.0
    %629 = vmatpush2.msra.mxu0 0.0
    %630 = vmatprep.subr.mxu0 0.0
    %631 = vmatpush2.msra.mxu0 0.0
    %632 = vmatprep.subr.mxu0 0.0
    %633 = vmatpush2.msra.mxu0 0.0
    %634 = vmatprep.subr.mxu0 0.0
    %635 = vmatpush2.msra.mxu0 0.0
    %636 = vmatprep.subr.mxu0 0.0
    %637 = vmatpush2.msra.mxu0 0.0
    %638 = vmatprep.subr.mxu0 0.0
    %639 = vmatpush2.msra.mxu0 0.0
    %640 = vmatprep.subr.mxu0 0.0
    %641 = vmatpush2.msra.mxu0 0.0
    %642 = vmatprep.subr.mxu0 0.0
    %643 = vmatpush2.msra.mxu0 0.0
    %644 = vmatprep.subr.mxu0 0.0
    %645 = vmatpush2.msra.mxu0 0.0
    %646 = vmatprep.subr.mxu0 0.0
    %647 = vmatpush2.msra.mxu0 0.0
    %648 = vmatprep.subr.mxu0 0.0
    %649 = vmatpush2.msra.mxu0 0.0
    %650 = vmatprep.subr.mxu0 0.0
    %651 = vmatpush2.msra.mxu0 0.0
    %652 = vmatprep.subr.mxu0 0.0
    %653 = vmatpush2.msra.mxu0 0.0
    %654 = vmatprep.mubr.f32.mxu0 0.0
    %v655 = vand.u32 %v90, 4294901760
    %656 = vmatmul.mubr.f32.gmra.mxu0 %v655
    %v657 = vpop.f32.mrf.mxu0
    %v658 = vadd.f32 %v539, %v657
    %v659 = vpop.f32.mrf.mxu0
    %660 = vdwg.mxu0
    %661 = vmatprep.subr.mxu0 0.0
    %v662 = vand.u32 %v106, 4294901760
    %663 = vmatpush1.msra.mxu0 %v662
    %664 = vmatprep.subr.mxu0 0.0
    %v665 = vand.u32 %v105, 4294901760
    %666 = vmatpush1.msra.mxu0 %v665
    %667 = vmatprep.subr.mxu0 0.0
    %v668 = vand.u32 %v104, 4294901760
    %669 = vmatpush1.msra.mxu0 %v668
    %670 = vmatprep.subr.mxu0 0.0
    %v671 = vand.u32 %v103, 4294901760
    %672 = vmatpush1.msra.mxu0 %v671
    %673 = vmatprep.subr.mxu0 0.0
    %v674 = vand.u32 %v102, 4294901760
    %675 = vmatpush1.msra.mxu0 %v674
    %676 = vmatprep.subr.mxu0 0.0
    %v677 = vand.u32 %v101, 4294901760
    %678 = vmatpush1.msra.mxu0 %v677
    %679 = vmatprep.subr.mxu0 0.0
    %v680 = vand.u32 %v100, 4294901760
    %681 = vmatpush1.msra.mxu0 %v680
    %682 = vmatprep.subr.mxu0 0.0
    %v683 = vand.u32 %v99, 4294901760
    %684 = vmatpush1.msra.mxu0 %v683
    %685 = vmatprep.subr.mxu0 0.0
    %v686 = vand.u32 %v98, 4294901760
    %687 = vmatpush1.msra.mxu0 %v686
    %688 = vmatprep.subr.mxu0 0.0
    %v689 = vand.u32 %v97, 4294901760
    %690 = vmatpush1.msra.mxu0 %v689
    %691 = vmatprep.subr.mxu0 0.0
    %v692 = vand.u32 %v96, 4294901760
    %693 = vmatpush1.msra.mxu0 %v692
    %694 = vmatprep.subr.mxu0 0.0
    %v695 = vand.u32 %v95, 4294901760
    %696 = vmatpush1.msra.mxu0 %v695
    %697 = vmatprep.subr.mxu0 0.0
    %v698 = vand.u32 %v94, 4294901760
    %699 = vmatpush1.msra.mxu0 %v698
    %700 = vmatprep.subr.mxu0 0.0
    %v701 = vand.u32 %v93, 4294901760
    %702 = vmatpush1.msra.mxu0 %v701
    %703 = vmatprep.subr.mxu0 0.0
    %v704 = vand.u32 %v92, 4294901760
    %705 = vmatpush1.msra.mxu0 %v704
    %706 = vmatprep.subr.mxu0 0.0
    %v707 = vand.u32 %v91, 4294901760
    %708 = vmatpush1.msra.mxu0 %v707
    %709 = vmatprep.subr.mxu0 0.0
    %710 = vmatpush2.msra.mxu0 0.0
    %711 = vmatprep.subr.mxu0 0.0
    %712 = vmatpush2.msra.mxu0 0.0
    %713 = vmatprep.subr.mxu0 0.0
    %714 = vmatpush2.msra.mxu0 0.0
    %715 = vmatprep.subr.mxu0 0.0
    %716 = vmatpush2.msra.mxu0 0.0
    %717 = vmatprep.subr.mxu0 0.0
    %718 = vmatpush2.msra.mxu0 0.0
    %719 = vmatprep.subr.mxu0 0.0
    %720 = vmatpush2.msra.mxu0 0.0
    %721 = vmatprep.subr.mxu0 0.0
    %722 = vmatpush2.msra.mxu0 0.0
    %723 = vmatprep.subr.mxu0 0.0
    %724 = vmatpush2.msra.mxu0 0.0
    %725 = vmatprep.subr.mxu0 0.0
    %726 = vmatpush2.msra.mxu0 0.0
    %727 = vmatprep.subr.mxu0 0.0
    %728 = vmatpush2.msra.mxu0 0.0
    %729 = vmatprep.subr.mxu0 0.0
    %730 = vmatpush2.msra.mxu0 0.0
    %731 = vmatprep.subr.mxu0 0.0
    %732 = vmatpush2.msra.mxu0 0.0
    %733 = vmatprep.subr.mxu0 0.0
    %734 = vmatpush2.msra.mxu0 0.0
    %735 = vmatprep.subr.mxu0 0.0
    %736 = vmatpush2.msra.mxu0 0.0
    %737 = vmatprep.subr.mxu0 0.0
    %738 = vmatpush2.msra.mxu0 0.0
    %739 = vmatprep.subr.mxu0 0.0
    %740 = vmatpush2.msra.mxu0 0.0
    %741 = vmatprep.mubr.f32.mxu0 0.0
    %v742 = vand.u32 %v90, 4294901760
    %743 = vmatmul.mubr.f32.gmra.mxu0 %v742
    %v744 = vpop.f32.mrf.mxu0
    %v745 = vadd.f32 %v658, %v744
    %v746 = vpop.f32.mrf.mxu0
    %747 = vdwg.mxu0
    %748 = vmatprep.subr.mxu0 0.0
    %v749 = vand.u32 %v41, 4294901760
    %750 = vmatpush1.msra.mxu0 %v749
    %751 = vmatprep.subr.mxu0 0.0
    %v752 = vand.u32 %v40, 4294901760
    %753 = vmatpush1.msra.mxu0 %v752
    %754 = vmatprep.subr.mxu0 0.0
    %v755 = vand.u32 %v39, 4294901760
    %756 = vmatpush1.msra.mxu0 %v755
    %757 = vmatprep.subr.mxu0 0.0
    %v758 = vand.u32 %v38, 4294901760
    %759 = vmatpush1.msra.mxu0 %v758
    %760 = vmatprep.subr.mxu0 0.0
    %v761 = vand.u32 %v37, 4294901760
    %762 = vmatpush1.msra.mxu0 %v761
    %763 = vmatprep.subr.mxu0 0.0
    %v764 = vand.u32 %v36, 4294901760
    %765 = vmatpush1.msra.mxu0 %v764
    %766 = vmatprep.subr.mxu0 0.0
    %v767 = vand.u32 %v35, 4294901760
    %768 = vmatpush1.msra.mxu0 %v767
    %769 = vmatprep.subr.mxu0 0.0
    %v770 = vand.u32 %v34, 4294901760
    %771 = vmatpush1.msra.mxu0 %v770
    %772 = vmatprep.subr.mxu0 0.0
    %v773 = vand.u32 %v33, 4294901760
    %774 = vmatpush1.msra.mxu0 %v773
    %775 = vmatprep.subr.mxu0 0.0
    %v776 = vand.u32 %v32, 4294901760
    %777 = vmatpush1.msra.mxu0 %v776
    %778 = vmatprep.subr.mxu0 0.0
    %v779 = vand.u32 %v31, 4294901760
    %780 = vmatpush1.msra.mxu0 %v779
    %781 = vmatprep.subr.mxu0 0.0
    %v782 = vand.u32 %v30, 4294901760
    %783 = vmatpush1.msra.mxu0 %v782
    %784 = vmatprep.subr.mxu0 0.0
    %v785 = vand.u32 %v29, 4294901760
    %786 = vmatpush1.msra.mxu0 %v785
    %787 = vmatprep.subr.mxu0 0.0
    %v788 = vand.u32 %v28, 4294901760
    %789 = vmatpush1.msra.mxu0 %v788
    %790 = vmatprep.subr.mxu0 0.0
    %v791 = vand.u32 %v27, 4294901760
    %792 = vmatpush1.msra.mxu0 %v791
    %793 = vmatprep.subr.mxu0 0.0
    %v794 = vand.u32 %v26, 4294901760
    %795 = vmatpush1.msra.mxu0 %v794
    %796 = vmatprep.subr.mxu0 0.0
    %v797 = vand.u32 %v57, 4294901760
    %798 = vmatpush2.msra.mxu0 %v797
    %799 = vmatprep.subr.mxu0 0.0
    %v800 = vand.u32 %v56, 4294901760
    %801 = vmatpush2.msra.mxu0 %v800
    %802 = vmatprep.subr.mxu0 0.0
    %v803 = vand.u32 %v55, 4294901760
    %804 = vmatpush2.msra.mxu0 %v803
    %805 = vmatprep.subr.mxu0 0.0
    %v806 = vand.u32 %v54, 4294901760
    %807 = vmatpush2.msra.mxu0 %v806
    %808 = vmatprep.subr.mxu0 0.0
    %v809 = vand.u32 %v53, 4294901760
    %810 = vmatpush2.msra.mxu0 %v809
    %811 = vmatprep.subr.mxu0 0.0
    %v812 = vand.u32 %v52, 4294901760
    %813 = vmatpush2.msra.mxu0 %v812
    %814 = vmatprep.subr.mxu0 0.0
    %v815 = vand.u32 %v51, 4294901760
    %816 = vmatpush2.msra.mxu0 %v815
    %817 = vmatprep.subr.mxu0 0.0
    %v818 = vand.u32 %v50, 4294901760
    %819 = vmatpush2.msra.mxu0 %v818
    %820 = vmatprep.subr.mxu0 0.0
    %v821 = vand.u32 %v49, 4294901760
    %822 = vmatpush2.msra.mxu0 %v821
    %823 = vmatprep.subr.mxu0 0.0
    %v824 = vand.u32 %v48, 4294901760
    %825 = vmatpush2.msra.mxu0 %v824
    %826 = vmatprep.subr.mxu0 0.0
    %v827 = vand.u32 %v47, 4294901760
    %828 = vmatpush2.msra.mxu0 %v827
    %829 = vmatprep.subr.mxu0 0.0
    %v830 = vand.u32 %v46, 4294901760
    %831 = vmatpush2.msra.mxu0 %v830
    %832 = vmatprep.subr.mxu0 0.0
    %v833 = vand.u32 %v45, 4294901760
    %834 = vmatpush2.msra.mxu0 %v833
    %835 = vmatprep.subr.mxu0 0.0
    %v836 = vand.u32 %v44, 4294901760
    %837 = vmatpush2.msra.mxu0 %v836
    %838 = vmatprep.subr.mxu0 0.0
    %v839 = vand.u32 %v43, 4294901760
    %840 = vmatpush2.msra.mxu0 %v839
    %841 = vmatprep.subr.mxu0 0.0
    %v842 = vand.u32 %v42, 4294901760
    %843 = vmatpush2.msra.mxu0 %v842
    %v844 = vand.u32 %v23, 4294901760
    %v845 = vsub.f32 %v23, %v844
    %v846 = vand.u32 %v845, 4294901760
    %v847 = vsub.f32 %v845, %v846
    %v848 = vand.u32 %v847, 4294901760
    %849 = vmatprep.mubr.f32.mxu0 %v848
    %v850 = vand.u32 %v22, 4294901760
    %v851 = vsub.f32 %v22, %v850
    %v852 = vand.u32 %v851, 4294901760
    %v853 = vsub.f32 %v851, %v852
    %v854 = vand.u32 %v853, 4294901760
    %855 = vmatmul.mubr.f32.gmra.mxu0 %v854
    %v856 = vpop.f32.mrf.mxu0
    %v857 = vadd.f32 %v745, %v856
    %v858 = vpop.f32.mrf.mxu0
    %859 = vdwg.mxu0
    %860 = vmatprep.subr.mxu0 0.0
    %v861 = vand.u32 %v41, 4294901760
    %v862 = vsub.f32 %v41, %v861
    %v863 = vand.u32 %v862, 4294901760
    %v864 = vsub.f32 %v862, %v863
    %v865 = vand.u32 %v864, 4294901760
    %866 = vmatpush1.msra.mxu0 %v865
    %867 = vmatprep.subr.mxu0 0.0
    %v868 = vand.u32 %v40, 4294901760
    %v869 = vsub.f32 %v40, %v868
    %v870 = vand.u32 %v869, 4294901760
    %v871 = vsub.f32 %v869, %v870
    %v872 = vand.u32 %v871, 4294901760
    %873 = vmatpush1.msra.mxu0 %v872
    %874 = vmatprep.subr.mxu0 0.0
    %v875 = vand.u32 %v39, 4294901760
    %v876 = vsub.f32 %v39, %v875
    %v877 = vand.u32 %v876, 4294901760
    %v878 = vsub.f32 %v876, %v877
    %v879 = vand.u32 %v878, 4294901760
    %880 = vmatpush1.msra.mxu0 %v879
    %881 = vmatprep.subr.mxu0 0.0
    %v882 = vand.u32 %v38, 4294901760
    %v883 = vsub.f32 %v38, %v882
    %v884 = vand.u32 %v883, 4294901760
    %v885 = vsub.f32 %v883, %v884
    %v886 = vand.u32 %v885, 4294901760
    %887 = vmatpush1.msra.mxu0 %v886
    %888 = vmatprep.subr.mxu0 0.0
    %v889 = vand.u32 %v37, 4294901760
    %v890 = vsub.f32 %v37, %v889
    %v891 = vand.u32 %v890, 4294901760
    %v892 = vsub.f32 %v890, %v891
    %v893 = vand.u32 %v892, 4294901760
    %894 = vmatpush1.msra.mxu0 %v893
    %895 = vmatprep.subr.mxu0 0.0
    %v896 = vand.u32 %v36, 4294901760
    %v897 = vsub.f32 %v36, %v896
    %v898 = vand.u32 %v897, 4294901760
    %v899 = vsub.f32 %v897, %v898
    %v900 = vand.u32 %v899, 4294901760
    %901 = vmatpush1.msra.mxu0 %v900
    %902 = vmatprep.subr.mxu0 0.0
    %v903 = vand.u32 %v35, 4294901760
    %v904 = vsub.f32 %v35, %v903
    %v905 = vand.u32 %v904, 4294901760
    %v906 = vsub.f32 %v904, %v905
    %v907 = vand.u32 %v906, 4294901760
    %908 = vmatpush1.msra.mxu0 %v907
    %909 = vmatprep.subr.mxu0 0.0
    %v910 = vand.u32 %v34, 4294901760
    %v911 = vsub.f32 %v34, %v910
    %v912 = vand.u32 %v911, 4294901760
    %v913 = vsub.f32 %v911, %v912
    %v914 = vand.u32 %v913, 4294901760
    %915 = vmatpush1.msra.mxu0 %v914
    %916 = vmatprep.subr.mxu0 0.0
    %v917 = vand.u32 %v33, 4294901760
    %v918 = vsub.f32 %v33, %v917
    %v919 = vand.u32 %v918, 4294901760
    %v920 = vsub.f32 %v918, %v919
    %v921 = vand.u32 %v920, 4294901760
    %922 = vmatpush1.msra.mxu0 %v921
    %923 = vmatprep.subr.mxu0 0.0
    %v924 = vand.u32 %v32, 4294901760
    %v925 = vsub.f32 %v32, %v924
    %v926 = vand.u32 %v925, 4294901760
    %v927 = vsub.f32 %v925, %v926
    %v928 = vand.u32 %v927, 4294901760
    %929 = vmatpush1.msra.mxu0 %v928
    %930 = vmatprep.subr.mxu0 0.0
    %v931 = vand.u32 %v31, 4294901760
    %v932 = vsub.f32 %v31, %v931
    %v933 = vand.u32 %v932, 4294901760
    %v934 = vsub.f32 %v932, %v933
    %v935 = vand.u32 %v934, 4294901760
    %936 = vmatpush1.msra.mxu0 %v935
    %937 = vmatprep.subr.mxu0 0.0
    %v938 = vand.u32 %v30, 4294901760
    %v939 = vsub.f32 %v30, %v938
    %v940 = vand.u32 %v939, 4294901760
    %v941 = vsub.f32 %v939, %v940
    %v942 = vand.u32 %v941, 4294901760
    %943 = vmatpush1.msra.mxu0 %v942
    %944 = vmatprep.subr.mxu0 0.0
    %v945 = vand.u32 %v29, 4294901760
    %v946 = vsub.f32 %v29, %v945
    %v947 = vand.u32 %v946, 4294901760
    %v948 = vsub.f32 %v946, %v947
    %v949 = vand.u32 %v948, 4294901760
    %950 = vmatpush1.msra.mxu0 %v949
    %951 = vmatprep.subr.mxu0 0.0
    %v952 = vand.u32 %v28, 4294901760
    %v953 = vsub.f32 %v28, %v952
    %v954 = vand.u32 %v953, 4294901760
    %v955 = vsub.f32 %v953, %v954
    %v956 = vand.u32 %v955, 4294901760
    %957 = vmatpush1.msra.mxu0 %v956
    %958 = vmatprep.subr.mxu0 0.0
    %v959 = vand.u32 %v27, 4294901760
    %v960 = vsub.f32 %v27, %v959
    %v961 = vand.u32 %v960, 4294901760
    %v962 = vsub.f32 %v960, %v961
    %v963 = vand.u32 %v962, 4294901760
    %964 = vmatpush1.msra.mxu0 %v963
    %965 = vmatprep.subr.mxu0 0.0
    %v966 = vand.u32 %v26, 4294901760
    %v967 = vsub.f32 %v26, %v966
    %v968 = vand.u32 %v967, 4294901760
    %v969 = vsub.f32 %v967, %v968
    %v970 = vand.u32 %v969, 4294901760
    %971 = vmatpush1.msra.mxu0 %v970
    %972 = vmatprep.subr.mxu0 0.0
    %v973 = vand.u32 %v57, 4294901760
    %v974 = vsub.f32 %v57, %v973
    %v975 = vand.u32 %v974, 4294901760
    %v976 = vsub.f32 %v974, %v975
    %v977 = vand.u32 %v976, 4294901760
    %978 = vmatpush2.msra.mxu0 %v977
    %979 = vmatprep.subr.mxu0 0.0
    %v980 = vand.u32 %v56, 4294901760
    %v981 = vsub.f32 %v56, %v980
    %v982 = vand.u32 %v981, 4294901760
    %v983 = vsub.f32 %v981, %v982
    %v984 = vand.u32 %v983, 4294901760
    %985 = vmatpush2.msra.mxu0 %v984
    %986 = vmatprep.subr.mxu0 0.0
    %v987 = vand.u32 %v55, 4294901760
    %v988 = vsub.f32 %v55, %v987
    %v989 = vand.u32 %v988, 4294901760
    %v990 = vsub.f32 %v988, %v989
    %v991 = vand.u32 %v990, 4294901760
    %992 = vmatpush2.msra.mxu0 %v991
    %993 = vmatprep.subr.mxu0 0.0
    %v994 = vand.u32 %v54, 4294901760
    %v995 = vsub.f32 %v54, %v994
    %v996 = vand.u32 %v995, 4294901760
    %v997 = vsub.f32 %v995, %v996
    %v998 = vand.u32 %v997, 4294901760
    %999 = vmatpush2.msra.mxu0 %v998
    %1000 = vmatprep.subr.mxu0 0.0
    %v1001 = vand.u32 %v53, 4294901760
    %v1002 = vsub.f32 %v53, %v1001
    %v1003 = vand.u32 %v1002, 4294901760
    %v1004 = vsub.f32 %v1002, %v1003
    %v1005 = vand.u32 %v1004, 4294901760
    %1006 = vmatpush2.msra.mxu0 %v1005
    %1007 = vmatprep.subr.mxu0 0.0
    %v1008 = vand.u32 %v52, 4294901760
    %v1009 = vsub.f32 %v52, %v1008
    %v1010 = vand.u32 %v1009, 4294901760
    %v1011 = vsub.f32 %v1009, %v1010
    %v1012 = vand.u32 %v1011, 4294901760
    %1013 = vmatpush2.msra.mxu0 %v1012
    %1014 = vmatprep.subr.mxu0 0.0
    %v1015 = vand.u32 %v51, 4294901760
    %v1016 = vsub.f32 %v51, %v1015
    %v1017 = vand.u32 %v1016, 4294901760
    %v1018 = vsub.f32 %v1016, %v1017
    %v1019 = vand.u32 %v1018, 4294901760
    %1020 = vmatpush2.msra.mxu0 %v1019
    %1021 = vmatprep.subr.mxu0 0.0
    %v1022 = vand.u32 %v50, 4294901760
    %v1023 = vsub.f32 %v50, %v1022
    %v1024 = vand.u32 %v1023, 4294901760
    %v1025 = vsub.f32 %v1023, %v1024
    %v1026 = vand.u32 %v1025, 4294901760
    %1027 = vmatpush2.msra.mxu0 %v1026
    %1028 = vmatprep.subr.mxu0 0.0
    %v1029 = vand.u32 %v49, 4294901760
    %v1030 = vsub.f32 %v49, %v1029
    %v1031 = vand.u32 %v1030, 4294901760
    %v1032 = vsub.f32 %v1030, %v1031
    %v1033 = vand.u32 %v1032, 4294901760
    %1034 = vmatpush2.msra.mxu0 %v1033
    %1035 = vmatprep.subr.mxu0 0.0
    %v1036 = vand.u32 %v48, 4294901760
    %v1037 = vsub.f32 %v48, %v1036
    %v1038 = vand.u32 %v1037, 4294901760
    %v1039 = vsub.f32 %v1037, %v1038
    %v1040 = vand.u32 %v1039, 4294901760
    %1041 = vmatpush2.msra.mxu0 %v1040
    %1042 = vmatprep.subr.mxu0 0.0
    %v1043 = vand.u32 %v47, 4294901760
    %v1044 = vsub.f32 %v47, %v1043
    %v1045 = vand.u32 %v1044, 4294901760
    %v1046 = vsub.f32 %v1044, %v1045
    %v1047 = vand.u32 %v1046, 4294901760
    %1048 = vmatpush2.msra.mxu0 %v1047
    %1049 = vmatprep.subr.mxu0 0.0
    %v1050 = vand.u32 %v46, 4294901760
    %v1051 = vsub.f32 %v46, %v1050
    %v1052 = vand.u32 %v1051, 4294901760
    %v1053 = vsub.f32 %v1051, %v1052
    %v1054 = vand.u32 %v1053, 4294901760
    %1055 = vmatpush2.msra.mxu0 %v1054
    %1056 = vmatprep.subr.mxu0 0.0
    %v1057 = vand.u32 %v45, 4294901760
    %v1058 = vsub.f32 %v45, %v1057
    %v1059 = vand.u32 %v1058, 4294901760
    %v1060 = vsub.f32 %v1058, %v1059
    %v1061 = vand.u32 %v1060, 4294901760
    %1062 = vmatpush2.msra.mxu0 %v1061
    %1063 = vmatprep.subr.mxu0 0.0
    %v1064 = vand.u32 %v44, 4294901760
    %v1065 = vsub.f32 %v44, %v1064
    %v1066 = vand.u32 %v1065, 4294901760
    %v1067 = vsub.f32 %v1065, %v1066
    %v1068 = vand.u32 %v1067, 4294901760
    %1069 = vmatpush2.msra.mxu0 %v1068
    %1070 = vmatprep.subr.mxu0 0.0
    %v1071 = vand.u32 %v43, 4294901760
    %v1072 = vsub.f32 %v43, %v1071
    %v1073 = vand.u32 %v1072, 4294901760
    %v1074 = vsub.f32 %v1072, %v1073
    %v1075 = vand.u32 %v1074, 4294901760
    %1076 = vmatpush2.msra.mxu0 %v1075
    %1077 = vmatprep.subr.mxu0 0.0
    %v1078 = vand.u32 %v42, 4294901760
    %v1079 = vsub.f32 %v42, %v1078
    %v1080 = vand.u32 %v1079, 4294901760
    %v1081 = vsub.f32 %v1079, %v1080
    %v1082 = vand.u32 %v1081, 4294901760
    %1083 = vmatpush2.msra.mxu0 %v1082
    %v1084 = vand.u32 %v23, 4294901760
    %1085 = vmatprep.mubr.f32.mxu0 %v1084
    %v1086 = vand.u32 %v22, 4294901760
    %1087 = vmatmul.mubr.f32.gmra.mxu0 %v1086
    %v1088 = vpop.f32.mrf.mxu0
    %v1089 = vadd.f32 %v857, %v1088
    %v1090 = vpop.f32.mrf.mxu0
    %1091 = vdwg.mxu0
    %1092 = vmatprep.subr.mxu0 0.0
    %v1093 = vand.u32 %v41, 4294901760
    %v1094 = vsub.f32 %v41, %v1093
    %1095 = vmatpush1.msra.mxu0 %v1094
    %1096 = vmatprep.subr.mxu0 0.0
    %v1097 = vand.u32 %v40, 4294901760
    %v1098 = vsub.f32 %v40, %v1097
    %1099 = vmatpush1.msra.mxu0 %v1098
    %1100 = vmatprep.subr.mxu0 0.0
    %v1101 = vand.u32 %v39, 4294901760
    %v1102 = vsub.f32 %v39, %v1101
    %1103 = vmatpush1.msra.mxu0 %v1102
    %1104 = vmatprep.subr.mxu0 0.0
    %v1105 = vand.u32 %v38, 4294901760
    %v1106 = vsub.f32 %v38, %v1105
    %1107 = vmatpush1.msra.mxu0 %v1106
    %1108 = vmatprep.subr.mxu0 0.0
    %v1109 = vand.u32 %v37, 4294901760
    %v1110 = vsub.f32 %v37, %v1109
    %1111 = vmatpush1.msra.mxu0 %v1110
    %1112 = vmatprep.subr.mxu0 0.0
    %v1113 = vand.u32 %v36, 4294901760
    %v1114 = vsub.f32 %v36, %v1113
    %1115 = vmatpush1.msra.mxu0 %v1114
    %1116 = vmatprep.subr.mxu0 0.0
    %v1117 = vand.u32 %v35, 4294901760
    %v1118 = vsub.f32 %v35, %v1117
    %1119 = vmatpush1.msra.mxu0 %v1118
    %1120 = vmatprep.subr.mxu0 0.0
    %v1121 = vand.u32 %v34, 4294901760
    %v1122 = vsub.f32 %v34, %v1121
    %1123 = vmatpush1.msra.mxu0 %v1122
    %1124 = vmatprep.subr.mxu0 0.0
    %v1125 = vand.u32 %v33, 4294901760
    %v1126 = vsub.f32 %v33, %v1125
    %1127 = vmatpush1.msra.mxu0 %v1126
    %1128 = vmatprep.subr.mxu0 0.0
    %v1129 = vand.u32 %v32, 4294901760
    %v1130 = vsub.f32 %v32, %v1129
    %1131 = vmatpush1.msra.mxu0 %v1130
    %1132 = vmatprep.subr.mxu0 0.0
    %v1133 = vand.u32 %v31, 4294901760
    %v1134 = vsub.f32 %v31, %v1133
    %1135 = vmatpush1.msra.mxu0 %v1134
    %1136 = vmatprep.subr.mxu0 0.0
    %v1137 = vand.u32 %v30, 4294901760
    %v1138 = vsub.f32 %v30, %v1137
    %1139 = vmatpush1.msra.mxu0 %v1138
    %1140 = vmatprep.subr.mxu0 0.0
    %v1141 = vand.u32 %v29, 4294901760
    %v1142 = vsub.f32 %v29, %v1141
    %1143 = vmatpush1.msra.mxu0 %v1142
    %1144 = vmatprep.subr.mxu0 0.0
    %v1145 = vand.u32 %v28, 4294901760
    %v1146 = vsub.f32 %v28, %v1145
    %1147 = vmatpush1.msra.mxu0 %v1146
    %1148 = vmatprep.subr.mxu0 0.0
    %v1149 = vand.u32 %v27, 4294901760
    %v1150 = vsub.f32 %v27, %v1149
    %1151 = vmatpush1.msra.mxu0 %v1150
    %1152 = vmatprep.subr.mxu0 0.0
    %v1153 = vand.u32 %v26, 4294901760
    %v1154 = vsub.f32 %v26, %v1153
    %1155 = vmatpush1.msra.mxu0 %v1154
    %1156 = vmatprep.subr.mxu0 0.0
    %v1157 = vand.u32 %v57, 4294901760
    %v1158 = vsub.f32 %v57, %v1157
    %1159 = vmatpush2.msra.mxu0 %v1158
    %1160 = vmatprep.subr.mxu0 0.0
    %v1161 = vand.u32 %v56, 4294901760
    %v1162 = vsub.f32 %v56, %v1161
    %1163 = vmatpush2.msra.mxu0 %v1162
    %1164 = vmatprep.subr.mxu0 0.0
    %v1165 = vand.u32 %v55, 4294901760
    %v1166 = vsub.f32 %v55, %v1165
    %1167 = vmatpush2.msra.mxu0 %v1166
    %1168 = vmatprep.subr.mxu0 0.0
    %v1169 = vand.u32 %v54, 4294901760
    %v1170 = vsub.f32 %v54, %v1169
    %1171 = vmatpush2.msra.mxu0 %v1170
    %1172 = vmatprep.subr.mxu0 0.0
    %v1173 = vand.u32 %v53, 4294901760
    %v1174 = vsub.f32 %v53, %v1173
    %1175 = vmatpush2.msra.mxu0 %v1174
    %1176 = vmatprep.subr.mxu0 0.0
    %v1177 = vand.u32 %v52, 4294901760
    %v1178 = vsub.f32 %v52, %v1177
    %1179 = vmatpush2.msra.mxu0 %v1178
    %1180 = vmatprep.subr.mxu0 0.0
    %v1181 = vand.u32 %v51, 4294901760
    %v1182 = vsub.f32 %v51, %v1181
    %1183 = vmatpush2.msra.mxu0 %v1182
    %1184 = vmatprep.subr.mxu0 0.0
    %v1185 = vand.u32 %v50, 4294901760
    %v1186 = vsub.f32 %v50, %v1185
    %1187 = vmatpush2.msra.mxu0 %v1186
    %1188 = vmatprep.subr.mxu0 0.0
    %v1189 = vand.u32 %v49, 4294901760
    %v1190 = vsub.f32 %v49, %v1189
    %1191 = vmatpush2.msra.mxu0 %v1190
    %1192 = vmatprep.subr.mxu0 0.0
    %v1193 = vand.u32 %v48, 4294901760
    %v1194 = vsub.f32 %v48, %v1193
    %1195 = vmatpush2.msra.mxu0 %v1194
    %1196 = vmatprep.subr.mxu0 0.0
    %v1197 = vand.u32 %v47, 4294901760
    %v1198 = vsub.f32 %v47, %v1197
    %1199 = vmatpush2.msra.mxu0 %v1198
    %1200 = vmatprep.subr.mxu0 0.0
    %v1201 = vand.u32 %v46, 4294901760
    %v1202 = vsub.f32 %v46, %v1201
    %1203 = vmatpush2.msra.mxu0 %v1202
    %1204 = vmatprep.subr.mxu0 0.0
    %v1205 = vand.u32 %v45, 4294901760
    %v1206 = vsub.f32 %v45, %v1205
    %1207 = vmatpush2.msra.mxu0 %v1206
    %1208 = vmatprep.subr.mxu0 0.0
    %v1209 = vand.u32 %v44, 4294901760
    %v1210 = vsub.f32 %v44, %v1209
    %1211 = vmatpush2.msra.mxu0 %v1210
    %1212 = vmatprep.subr.mxu0 0.0
    %v1213 = vand.u32 %v43, 4294901760
    %v1214 = vsub.f32 %v43, %v1213
    %1215 = vmatpush2.msra.mxu0 %v1214
    %1216 = vmatprep.subr.mxu0 0.0
    %v1217 = vand.u32 %v42, 4294901760
    %v1218 = vsub.f32 %v42, %v1217
    %1219 = vmatpush2.msra.mxu0 %v1218
    %v1220 = vand.u32 %v23, 4294901760
    %v1221 = vsub.f32 %v23, %v1220
    %1222 = vmatprep.mubr.f32.mxu0 %v1221
    %v1223 = vand.u32 %v22, 4294901760
    %v1224 = vsub.f32 %v22, %v1223
    %1225 = vmatmul.mubr.f32.gmra.mxu0 %v1224
    %v1226 = vpop.f32.mrf.mxu0
    %v1227 = vadd.f32 %v1089, %v1226
    %v1228 = vpop.f32.mrf.mxu0
    %1229 = vdwg.mxu0
    %1230 = vmatprep.subr.mxu0 0.0
    %v1231 = vand.u32 %v41, 4294901760
    %1232 = vmatpush1.msra.mxu0 %v1231
    %1233 = vmatprep.subr.mxu0 0.0
    %v1234 = vand.u32 %v40, 4294901760
    %1235 = vmatpush1.msra.mxu0 %v1234
    %1236 = vmatprep.subr.mxu0 0.0
    %v1237 = vand.u32 %v39, 4294901760
    %1238 = vmatpush1.msra.mxu0 %v1237
    %1239 = vmatprep.subr.mxu0 0.0
    %v1240 = vand.u32 %v38, 4294901760
    %1241 = vmatpush1.msra.mxu0 %v1240
    %1242 = vmatprep.subr.mxu0 0.0
    %v1243 = vand.u32 %v37, 4294901760
    %1244 = vmatpush1.msra.mxu0 %v1243
    %1245 = vmatprep.subr.mxu0 0.0
    %v1246 = vand.u32 %v36, 4294901760
    %1247 = vmatpush1.msra.mxu0 %v1246
    %1248 = vmatprep.subr.mxu0 0.0
    %v1249 = vand.u32 %v35, 4294901760
    %1250 = vmatpush1.msra.mxu0 %v1249
    %1251 = vmatprep.subr.mxu0 0.0
    %v1252 = vand.u32 %v34, 4294901760
    %1253 = vmatpush1.msra.mxu0 %v1252
    %1254 = vmatprep.subr.mxu0 0.0
    %v1255 = vand.u32 %v33, 4294901760
    %1256 = vmatpush1.msra.mxu0 %v1255
    %1257 = vmatprep.subr.mxu0 0.0
    %v1258 = vand.u32 %v32, 4294901760
    %1259 = vmatpush1.msra.mxu0 %v1258
    %1260 = vmatprep.subr.mxu0 0.0
    %v1261 = vand.u32 %v31, 4294901760
    %1262 = vmatpush1.msra.mxu0 %v1261
    %1263 = vmatprep.subr.mxu0 0.0
    %v1264 = vand.u32 %v30, 4294901760
    %1265 = vmatpush1.msra.mxu0 %v1264
    %1266 = vmatprep.subr.mxu0 0.0
    %v1267 = vand.u32 %v29, 4294901760
    %1268 = vmatpush1.msra.mxu0 %v1267
    %1269 = vmatprep.subr.mxu0 0.0
    %v1270 = vand.u32 %v28, 4294901760
    %1271 = vmatpush1.msra.mxu0 %v1270
    %1272 = vmatprep.subr.mxu0 0.0
    %v1273 = vand.u32 %v27, 4294901760
    %1274 = vmatpush1.msra.mxu0 %v1273
    %1275 = vmatprep.subr.mxu0 0.0
    %v1276 = vand.u32 %v26, 4294901760
    %1277 = vmatpush1.msra.mxu0 %v1276
    %1278 = vmatprep.subr.mxu0 0.0
    %v1279 = vand.u32 %v57, 4294901760
    %1280 = vmatpush2.msra.mxu0 %v1279
    %1281 = vmatprep.subr.mxu0 0.0
    %v1282 = vand.u32 %v56, 4294901760
    %1283 = vmatpush2.msra.mxu0 %v1282
    %1284 = vmatprep.subr.mxu0 0.0
    %v1285 = vand.u32 %v55, 4294901760
    %1286 = vmatpush2.msra.mxu0 %v1285
    %1287 = vmatprep.subr.mxu0 0.0
    %v1288 = vand.u32 %v54, 4294901760
    %1289 = vmatpush2.msra.mxu0 %v1288
    %1290 = vmatprep.subr.mxu0 0.0
    %v1291 = vand.u32 %v53, 4294901760
    %1292 = vmatpush2.msra.mxu0 %v1291
    %1293 = vmatprep.subr.mxu0 0.0
    %v1294 = vand.u32 %v52, 4294901760
    %1295 = vmatpush2.msra.mxu0 %v1294
    %1296 = vmatprep.subr.mxu0 0.0
    %v1297 = vand.u32 %v51, 4294901760
    %1298 = vmatpush2.msra.mxu0 %v1297
    %1299 = vmatprep.subr.mxu0 0.0
    %v1300 = vand.u32 %v50, 4294901760
    %1301 = vmatpush2.msra.mxu0 %v1300
    %1302 = vmatprep.subr.mxu0 0.0
    %v1303 = vand.u32 %v49, 4294901760
    %1304 = vmatpush2.msra.mxu0 %v1303
    %1305 = vmatprep.subr.mxu0 0.0
    %v1306 = vand.u32 %v48, 4294901760
    %1307 = vmatpush2.msra.mxu0 %v1306
    %1308 = vmatprep.subr.mxu0 0.0
    %v1309 = vand.u32 %v47, 4294901760
    %1310 = vmatpush2.msra.mxu0 %v1309
    %1311 = vmatprep.subr.mxu0 0.0
    %v1312 = vand.u32 %v46, 4294901760
    %1313 = vmatpush2.msra.mxu0 %v1312
    %1314 = vmatprep.subr.mxu0 0.0
    %v1315 = vand.u32 %v45, 4294901760
    %1316 = vmatpush2.msra.mxu0 %v1315
    %1317 = vmatprep.subr.mxu0 0.0
    %v1318 = vand.u32 %v44, 4294901760
    %1319 = vmatpush2.msra.mxu0 %v1318
    %1320 = vmatprep.subr.mxu0 0.0
    %v1321 = vand.u32 %v43, 4294901760
    %1322 = vmatpush2.msra.mxu0 %v1321
    %1323 = vmatprep.subr.mxu0 0.0
    %v1324 = vand.u32 %v42, 4294901760
    %1325 = vmatpush2.msra.mxu0 %v1324
    %v1326 = vand.u32 %v23, 4294901760
    %v1327 = vsub.f32 %v23, %v1326
    %v1328 = vand.u32 %v1327, 4294901760
    %1329 = vmatprep.mubr.f32.mxu0 %v1328
    %v1330 = vand.u32 %v22, 4294901760
    %v1331 = vsub.f32 %v22, %v1330
    %v1332 = vand.u32 %v1331, 4294901760
    %1333 = vmatmul.mubr.f32.gmra.mxu0 %v1332
    %v1334 = vpop.f32.mrf.mxu0
    %v1335 = vadd.f32 %v1227, %v1334
    %v1336 = vpop.f32.mrf.mxu0
    %1337 = vdwg.mxu0
    %1338 = vmatprep.subr.mxu0 0.0
    %v1339 = vand.u32 %v41, 4294901760
    %v1340 = vsub.f32 %v41, %v1339
    %v1341 = vand.u32 %v1340, 4294901760
    %1342 = vmatpush1.msra.mxu0 %v1341
    %1343 = vmatprep.subr.mxu0 0.0
    %v1344 = vand.u32 %v40, 4294901760
    %v1345 = vsub.f32 %v40, %v1344
    %v1346 = vand.u32 %v1345, 4294901760
    %1347 = vmatpush1.msra.mxu0 %v1346
    %1348 = vmatprep.subr.mxu0 0.0
    %v1349 = vand.u32 %v39, 4294901760
    %v1350 = vsub.f32 %v39, %v1349
    %v1351 = vand.u32 %v1350, 4294901760
    %1352 = vmatpush1.msra.mxu0 %v1351
    %1353 = vmatprep.subr.mxu0 0.0
    %v1354 = vand.u32 %v38, 4294901760
    %v1355 = vsub.f32 %v38, %v1354
    %v1356 = vand.u32 %v1355, 4294901760
    %1357 = vmatpush1.msra.mxu0 %v1356
    %1358 = vmatprep.subr.mxu0 0.0
    %v1359 = vand.u32 %v37, 4294901760
    %v1360 = vsub.f32 %v37, %v1359
    %v1361 = vand.u32 %v1360, 4294901760
    %1362 = vmatpush1.msra.mxu0 %v1361
    %1363 = vmatprep.subr.mxu0 0.0
    %v1364 = vand.u32 %v36, 4294901760
    %v1365 = vsub.f32 %v36, %v1364
    %v1366 = vand.u32 %v1365, 4294901760
    %1367 = vmatpush1.msra.mxu0 %v1366
    %1368 = vmatprep.subr.mxu0 0.0
    %v1369 = vand.u32 %v35, 4294901760
    %v1370 = vsub.f32 %v35, %v1369
    %v1371 = vand.u32 %v1370, 4294901760
    %1372 = vmatpush1.msra.mxu0 %v1371
    %1373 = vmatprep.subr.mxu0 0.0
    %v1374 = vand.u32 %v34, 4294901760
    %v1375 = vsub.f32 %v34, %v1374
    %v1376 = vand.u32 %v1375, 4294901760
    %1377 = vmatpush1.msra.mxu0 %v1376
    %1378 = vmatprep.subr.mxu0 0.0
    %v1379 = vand.u32 %v33, 4294901760
    %v1380 = vsub.f32 %v33, %v1379
    %v1381 = vand.u32 %v1380, 4294901760
    %1382 = vmatpush1.msra.mxu0 %v1381
    %1383 = vmatprep.subr.mxu0 0.0
    %v1384 = vand.u32 %v32, 4294901760
    %v1385 = vsub.f32 %v32, %v1384
    %v1386 = vand.u32 %v1385, 4294901760
    %1387 = vmatpush1.msra.mxu0 %v1386
    %1388 = vmatprep.subr.mxu0 0.0
    %v1389 = vand.u32 %v31, 4294901760
    %v1390 = vsub.f32 %v31, %v1389
    %v1391 = vand.u32 %v1390, 4294901760
    %1392 = vmatpush1.msra.mxu0 %v1391
    %1393 = vmatprep.subr.mxu0 0.0
    %v1394 = vand.u32 %v30, 4294901760
    %v1395 = vsub.f32 %v30, %v1394
    %v1396 = vand.u32 %v1395, 4294901760
    %1397 = vmatpush1.msra.mxu0 %v1396
    %1398 = vmatprep.subr.mxu0 0.0
    %v1399 = vand.u32 %v29, 4294901760
    %v1400 = vsub.f32 %v29, %v1399
    %v1401 = vand.u32 %v1400, 4294901760
    %1402 = vmatpush1.msra.mxu0 %v1401
    %1403 = vmatprep.subr.mxu0 0.0
    %v1404 = vand.u32 %v28, 4294901760
    %v1405 = vsub.f32 %v28, %v1404
    %v1406 = vand.u32 %v1405, 4294901760
    %1407 = vmatpush1.msra.mxu0 %v1406
    %1408 = vmatprep.subr.mxu0 0.0
    %v1409 = vand.u32 %v27, 4294901760
    %v1410 = vsub.f32 %v27, %v1409
    %v1411 = vand.u32 %v1410, 4294901760
    %1412 = vmatpush1.msra.mxu0 %v1411
    %1413 = vmatprep.subr.mxu0 0.0
    %v1414 = vand.u32 %v26, 4294901760
    %v1415 = vsub.f32 %v26, %v1414
    %v1416 = vand.u32 %v1415, 4294901760
    %1417 = vmatpush1.msra.mxu0 %v1416
    %1418 = vmatprep.subr.mxu0 0.0
    %v1419 = vand.u32 %v57, 4294901760
    %v1420 = vsub.f32 %v57, %v1419
    %v1421 = vand.u32 %v1420, 4294901760
    %1422 = vmatpush2.msra.mxu0 %v1421
    %1423 = vmatprep.subr.mxu0 0.0
    %v1424 = vand.u32 %v56, 4294901760
    %v1425 = vsub.f32 %v56, %v1424
    %v1426 = vand.u32 %v1425, 4294901760
    %1427 = vmatpush2.msra.mxu0 %v1426
    %1428 = vmatprep.subr.mxu0 0.0
    %v1429 = vand.u32 %v55, 4294901760
    %v1430 = vsub.f32 %v55, %v1429
    %v1431 = vand.u32 %v1430, 4294901760
    %1432 = vmatpush2.msra.mxu0 %v1431
    %1433 = vmatprep.subr.mxu0 0.0
    %v1434 = vand.u32 %v54, 4294901760
    %v1435 = vsub.f32 %v54, %v1434
    %v1436 = vand.u32 %v1435, 4294901760
    %1437 = vmatpush2.msra.mxu0 %v1436
    %1438 = vmatprep.subr.mxu0 0.0
    %v1439 = vand.u32 %v53, 4294901760
    %v1440 = vsub.f32 %v53, %v1439
    %v1441 = vand.u32 %v1440, 4294901760
    %1442 = vmatpush2.msra.mxu0 %v1441
    %1443 = vmatprep.subr.mxu0 0.0
    %v1444 = vand.u32 %v52, 4294901760
    %v1445 = vsub.f32 %v52, %v1444
    %v1446 = vand.u32 %v1445, 4294901760
    %1447 = vmatpush2.msra.mxu0 %v1446
    %1448 = vmatprep.subr.mxu0 0.0
    %v1449 = vand.u32 %v51, 4294901760
    %v1450 = vsub.f32 %v51, %v1449
    %v1451 = vand.u32 %v1450, 4294901760
    %1452 = vmatpush2.msra.mxu0 %v1451
    %1453 = vmatprep.subr.mxu0 0.0
    %v1454 = vand.u32 %v50, 4294901760
    %v1455 = vsub.f32 %v50, %v1454
    %v1456 = vand.u32 %v1455, 4294901760
    %1457 = vmatpush2.msra.mxu0 %v1456
    %1458 = vmatprep.subr.mxu0 0.0
    %v1459 = vand.u32 %v49, 4294901760
    %v1460 = vsub.f32 %v49, %v1459
    %v1461 = vand.u32 %v1460, 4294901760
    %1462 = vmatpush2.msra.mxu0 %v1461
    %1463 = vmatprep.subr.mxu0 0.0
    %v1464 = vand.u32 %v48, 4294901760
    %v1465 = vsub.f32 %v48, %v1464
    %v1466 = vand.u32 %v1465, 4294901760
    %1467 = vmatpush2.msra.mxu0 %v1466
    %1468 = vmatprep.subr.mxu0 0.0
    %v1469 = vand.u32 %v47, 4294901760
    %v1470 = vsub.f32 %v47, %v1469
    %v1471 = vand.u32 %v1470, 4294901760
    %1472 = vmatpush2.msra.mxu0 %v1471
    %1473 = vmatprep.subr.mxu0 0.0
    %v1474 = vand.u32 %v46, 4294901760
    %v1475 = vsub.f32 %v46, %v1474
    %v1476 = vand.u32 %v1475, 4294901760
    %1477 = vmatpush2.msra.mxu0 %v1476
    %1478 = vmatprep.subr.mxu0 0.0
    %v1479 = vand.u32 %v45, 4294901760
    %v1480 = vsub.f32 %v45, %v1479
    %v1481 = vand.u32 %v1480, 4294901760
    %1482 = vmatpush2.msra.mxu0 %v1481
    %1483 = vmatprep.subr.mxu0 0.0
    %v1484 = vand.u32 %v44, 4294901760
    %v1485 = vsub.f32 %v44, %v1484
    %v1486 = vand.u32 %v1485, 4294901760
    %1487 = vmatpush2.msra.mxu0 %v1486
    %1488 = vmatprep.subr.mxu0 0.0
    %v1489 = vand.u32 %v43, 4294901760
    %v1490 = vsub.f32 %v43, %v1489
    %v1491 = vand.u32 %v1490, 4294901760
    %1492 = vmatpush2.msra.mxu0 %v1491
    %1493 = vmatprep.subr.mxu0 0.0
    %v1494 = vand.u32 %v42, 4294901760
    %v1495 = vsub.f32 %v42, %v1494
    %v1496 = vand.u32 %v1495, 4294901760
    %1497 = vmatpush2.msra.mxu0 %v1496
    %v1498 = vand.u32 %v23, 4294901760
    %1499 = vmatprep.mubr.f32.mxu0 %v1498
    %v1500 = vand.u32 %v22, 4294901760
    %1501 = vmatmul.mubr.f32.gmra.mxu0 %v1500
    %v1502 = vpop.f32.mrf.mxu0
    %v1503 = vadd.f32 %v1335, %v1502
    %v1504 = vpop.f32.mrf.mxu0
    %1505 = vdwg.mxu0
    %1506 = vmatprep.subr.mxu0 0.0
    %v1507 = vand.u32 %v41, 4294901760
    %1508 = vmatpush1.msra.mxu0 %v1507
    %1509 = vmatprep.subr.mxu0 0.0
    %v1510 = vand.u32 %v40, 4294901760
    %1511 = vmatpush1.msra.mxu0 %v1510
    %1512 = vmatprep.subr.mxu0 0.0
    %v1513 = vand.u32 %v39, 4294901760
    %1514 = vmatpush1.msra.mxu0 %v1513
    %1515 = vmatprep.subr.mxu0 0.0
    %v1516 = vand.u32 %v38, 4294901760
    %1517 = vmatpush1.msra.mxu0 %v1516
    %1518 = vmatprep.subr.mxu0 0.0
    %v1519 = vand.u32 %v37, 4294901760
    %1520 = vmatpush1.msra.mxu0 %v1519
    %1521 = vmatprep.subr.mxu0 0.0
    %v1522 = vand.u32 %v36, 4294901760
    %1523 = vmatpush1.msra.mxu0 %v1522
    %1524 = vmatprep.subr.mxu0 0.0
    %v1525 = vand.u32 %v35, 4294901760
    %1526 = vmatpush1.msra.mxu0 %v1525
    %1527 = vmatprep.subr.mxu0 0.0
    %v1528 = vand.u32 %v34, 4294901760
    %1529 = vmatpush1.msra.mxu0 %v1528
    %1530 = vmatprep.subr.mxu0 0.0
    %v1531 = vand.u32 %v33, 4294901760
    %1532 = vmatpush1.msra.mxu0 %v1531
    %1533 = vmatprep.subr.mxu0 0.0
    %v1534 = vand.u32 %v32, 4294901760
    %1535 = vmatpush1.msra.mxu0 %v1534
    %1536 = vmatprep.subr.mxu0 0.0
    %v1537 = vand.u32 %v31, 4294901760
    %1538 = vmatpush1.msra.mxu0 %v1537
    %1539 = vmatprep.subr.mxu0 0.0
    %v1540 = vand.u32 %v30, 4294901760
    %1541 = vmatpush1.msra.mxu0 %v1540
    %1542 = vmatprep.subr.mxu0 0.0
    %v1543 = vand.u32 %v29, 4294901760
    %1544 = vmatpush1.msra.mxu0 %v1543
    %1545 = vmatprep.subr.mxu0 0.0
    %v1546 = vand.u32 %v28, 4294901760
    %1547 = vmatpush1.msra.mxu0 %v1546
    %1548 = vmatprep.subr.mxu0 0.0
    %v1549 = vand.u32 %v27, 4294901760
    %1550 = vmatpush1.msra.mxu0 %v1549
    %1551 = vmatprep.subr.mxu0 0.0
    %v1552 = vand.u32 %v26, 4294901760
    %1553 = vmatpush1.msra.mxu0 %v1552
    %1554 = vmatprep.subr.mxu0 0.0
    %v1555 = vand.u32 %v57, 4294901760
    %1556 = vmatpush2.msra.mxu0 %v1555
    %1557 = vmatprep.subr.mxu0 0.0
    %v1558 = vand.u32 %v56, 4294901760
    %1559 = vmatpush2.msra.mxu0 %v1558
    %1560 = vmatprep.subr.mxu0 0.0
    %v1561 = vand.u32 %v55, 4294901760
    %1562 = vmatpush2.msra.mxu0 %v1561
    %1563 = vmatprep.subr.mxu0 0.0
    %v1564 = vand.u32 %v54, 4294901760
    %1565 = vmatpush2.msra.mxu0 %v1564
    %1566 = vmatprep.subr.mxu0 0.0
    %v1567 = vand.u32 %v53, 4294901760
    %1568 = vmatpush2.msra.mxu0 %v1567
    %1569 = vmatprep.subr.mxu0 0.0
    %v1570 = vand.u32 %v52, 4294901760
    %1571 = vmatpush2.msra.mxu0 %v1570
    %1572 = vmatprep.subr.mxu0 0.0
    %v1573 = vand.u32 %v51, 4294901760
    %1574 = vmatpush2.msra.mxu0 %v1573
    %1575 = vmatprep.subr.mxu0 0.0
    %v1576 = vand.u32 %v50, 4294901760
    %1577 = vmatpush2.msra.mxu0 %v1576
    %1578 = vmatprep.subr.mxu0 0.0
    %v1579 = vand.u32 %v49, 4294901760
    %1580 = vmatpush2.msra.mxu0 %v1579
    %1581 = vmatprep.subr.mxu0 0.0
    %v1582 = vand.u32 %v48, 4294901760
    %1583 = vmatpush2.msra.mxu0 %v1582
    %1584 = vmatprep.subr.mxu0 0.0
    %v1585 = vand.u32 %v47, 4294901760
    %1586 = vmatpush2.msra.mxu0 %v1585
    %1587 = vmatprep.subr.mxu0 0.0
    %v1588 = vand.u32 %v46, 4294901760
    %1589 = vmatpush2.msra.mxu0 %v1588
    %1590 = vmatprep.subr.mxu0 0.0
    %v1591 = vand.u32 %v45, 4294901760
    %1592 = vmatpush2.msra.mxu0 %v1591
    %1593 = vmatprep.subr.mxu0 0.0
    %v1594 = vand.u32 %v44, 4294901760
    %1595 = vmatpush2.msra.mxu0 %v1594
    %1596 = vmatprep.subr.mxu0 0.0
    %v1597 = vand.u32 %v43, 4294901760
    %1598 = vmatpush2.msra.mxu0 %v1597
    %1599 = vmatprep.subr.mxu0 0.0
    %v1600 = vand.u32 %v42, 4294901760
    %1601 = vmatpush2.msra.mxu0 %v1600
    %v1602 = vand.u32 %v23, 4294901760
    %1603 = vmatprep.mubr.f32.mxu0 %v1602
    %v1604 = vand.u32 %v22, 4294901760
    %1605 = vmatmul.mubr.f32.gmra.mxu0 %v1604
    %v1606 = vpop.f32.mrf.mxu0
    %v1607 = vadd.f32 %v1503, %v1606
    %v1608 = vpop.f32.mrf.mxu0
    %1609 = vdwg.mxu0
    %1610 = vmatprep.subr.mxu0 0.0
    %v1611 = vand.u32 %v73, 4294901760
    %1612 = vmatpush1.msra.mxu0 %v1611
    %1613 = vmatprep.subr.mxu0 0.0
    %v1614 = vand.u32 %v72, 4294901760
    %1615 = vmatpush1.msra.mxu0 %v1614
    %1616 = vmatprep.subr.mxu0 0.0
    %v1617 = vand.u32 %v71, 4294901760
    %1618 = vmatpush1.msra.mxu0 %v1617
    %1619 = vmatprep.subr.mxu0 0.0
    %v1620 = vand.u32 %v70, 4294901760
    %1621 = vmatpush1.msra.mxu0 %v1620
    %1622 = vmatprep.subr.mxu0 0.0
    %v1623 = vand.u32 %v69, 4294901760
    %1624 = vmatpush1.msra.mxu0 %v1623
    %1625 = vmatprep.subr.mxu0 0.0
    %v1626 = vand.u32 %v68, 4294901760
    %1627 = vmatpush1.msra.mxu0 %v1626
    %1628 = vmatprep.subr.mxu0 0.0
    %v1629 = vand.u32 %v67, 4294901760
    %1630 = vmatpush1.msra.mxu0 %v1629
    %1631 = vmatprep.subr.mxu0 0.0
    %v1632 = vand.u32 %v66, 4294901760
    %1633 = vmatpush1.msra.mxu0 %v1632
    %1634 = vmatprep.subr.mxu0 0.0
    %v1635 = vand.u32 %v65, 4294901760
    %1636 = vmatpush1.msra.mxu0 %v1635
    %1637 = vmatprep.subr.mxu0 0.0
    %v1638 = vand.u32 %v64, 4294901760
    %1639 = vmatpush1.msra.mxu0 %v1638
    %1640 = vmatprep.subr.mxu0 0.0
    %v1641 = vand.u32 %v63, 4294901760
    %1642 = vmatpush1.msra.mxu0 %v1641
    %1643 = vmatprep.subr.mxu0 0.0
    %v1644 = vand.u32 %v62, 4294901760
    %1645 = vmatpush1.msra.mxu0 %v1644
    %1646 = vmatprep.subr.mxu0 0.0
    %v1647 = vand.u32 %v61, 4294901760
    %1648 = vmatpush1.msra.mxu0 %v1647
    %1649 = vmatprep.subr.mxu0 0.0
    %v1650 = vand.u32 %v60, 4294901760
    %1651 = vmatpush1.msra.mxu0 %v1650
    %1652 = vmatprep.subr.mxu0 0.0
    %v1653 = vand.u32 %v59, 4294901760
    %1654 = vmatpush1.msra.mxu0 %v1653
    %1655 = vmatprep.subr.mxu0 0.0
    %v1656 = vand.u32 %v58, 4294901760
    %1657 = vmatpush1.msra.mxu0 %v1656
    %1658 = vmatprep.subr.mxu0 0.0
    %v1659 = vand.u32 %v89, 4294901760
    %1660 = vmatpush2.msra.mxu0 %v1659
    %1661 = vmatprep.subr.mxu0 0.0
    %v1662 = vand.u32 %v88, 4294901760
    %1663 = vmatpush2.msra.mxu0 %v1662
    %1664 = vmatprep.subr.mxu0 0.0
    %v1665 = vand.u32 %v87, 4294901760
    %1666 = vmatpush2.msra.mxu0 %v1665
    %1667 = vmatprep.subr.mxu0 0.0
    %v1668 = vand.u32 %v86, 4294901760
    %1669 = vmatpush2.msra.mxu0 %v1668
    %1670 = vmatprep.subr.mxu0 0.0
    %v1671 = vand.u32 %v85, 4294901760
    %1672 = vmatpush2.msra.mxu0 %v1671
    %1673 = vmatprep.subr.mxu0 0.0
    %v1674 = vand.u32 %v84, 4294901760
    %1675 = vmatpush2.msra.mxu0 %v1674
    %1676 = vmatprep.subr.mxu0 0.0
    %v1677 = vand.u32 %v83, 4294901760
    %1678 = vmatpush2.msra.mxu0 %v1677
    %1679 = vmatprep.subr.mxu0 0.0
    %v1680 = vand.u32 %v82, 4294901760
    %1681 = vmatpush2.msra.mxu0 %v1680
    %1682 = vmatprep.subr.mxu0 0.0
    %v1683 = vand.u32 %v81, 4294901760
    %1684 = vmatpush2.msra.mxu0 %v1683
    %1685 = vmatprep.subr.mxu0 0.0
    %v1686 = vand.u32 %v80, 4294901760
    %1687 = vmatpush2.msra.mxu0 %v1686
    %1688 = vmatprep.subr.mxu0 0.0
    %v1689 = vand.u32 %v79, 4294901760
    %1690 = vmatpush2.msra.mxu0 %v1689
    %1691 = vmatprep.subr.mxu0 0.0
    %v1692 = vand.u32 %v78, 4294901760
    %1693 = vmatpush2.msra.mxu0 %v1692
    %1694 = vmatprep.subr.mxu0 0.0
    %v1695 = vand.u32 %v77, 4294901760
    %1696 = vmatpush2.msra.mxu0 %v1695
    %1697 = vmatprep.subr.mxu0 0.0
    %v1698 = vand.u32 %v76, 4294901760
    %1699 = vmatpush2.msra.mxu0 %v1698
    %1700 = vmatprep.subr.mxu0 0.0
    %v1701 = vand.u32 %v75, 4294901760
    %1702 = vmatpush2.msra.mxu0 %v1701
    %1703 = vmatprep.subr.mxu0 0.0
    %v1704 = vand.u32 %v74, 4294901760
    %1705 = vmatpush2.msra.mxu0 %v1704
    %v1706 = vand.u32 %v25, 4294901760
    %v1707 = vsub.f32 %v25, %v1706
    %v1708 = vand.u32 %v1707, 4294901760
    %v1709 = vsub.f32 %v1707, %v1708
    %v1710 = vand.u32 %v1709, 4294901760
    %1711 = vmatprep.mubr.f32.mxu0 %v1710
    %v1712 = vand.u32 %v24, 4294901760
    %v1713 = vsub.f32 %v24, %v1712
    %v1714 = vand.u32 %v1713, 4294901760
    %v1715 = vsub.f32 %v1713, %v1714
    %v1716 = vand.u32 %v1715, 4294901760
    %1717 = vmatmul.mubr.f32.gmra.mxu0 %v1716
    %v1718 = vpop.f32.mrf.mxu0
    %v1719 = vadd.f32 %v1607, %v1718
    %v1720 = vpop.f32.mrf.mxu0
    %1721 = vdwg.mxu0
    %1722 = vmatprep.subr.mxu0 0.0
    %v1723 = vand.u32 %v73, 4294901760
    %v1724 = vsub.f32 %v73, %v1723
    %v1725 = vand.u32 %v1724, 4294901760
    %v1726 = vsub.f32 %v1724, %v1725
    %v1727 = vand.u32 %v1726, 4294901760
    %1728 = vmatpush1.msra.mxu0 %v1727
    %1729 = vmatprep.subr.mxu0 0.0
    %v1730 = vand.u32 %v72, 4294901760
    %v1731 = vsub.f32 %v72, %v1730
    %v1732 = vand.u32 %v1731, 4294901760
    %v1733 = vsub.f32 %v1731, %v1732
    %v1734 = vand.u32 %v1733, 4294901760
    %1735 = vmatpush1.msra.mxu0 %v1734
    %1736 = vmatprep.subr.mxu0 0.0
    %v1737 = vand.u32 %v71, 4294901760
    %v1738 = vsub.f32 %v71, %v1737
    %v1739 = vand.u32 %v1738, 4294901760
    %v1740 = vsub.f32 %v1738, %v1739
    %v1741 = vand.u32 %v1740, 4294901760
    %1742 = vmatpush1.msra.mxu0 %v1741
    %1743 = vmatprep.subr.mxu0 0.0
    %v1744 = vand.u32 %v70, 4294901760
    %v1745 = vsub.f32 %v70, %v1744
    %v1746 = vand.u32 %v1745, 4294901760
    %v1747 = vsub.f32 %v1745, %v1746
    %v1748 = vand.u32 %v1747, 4294901760
    %1749 = vmatpush1.msra.mxu0 %v1748
    %1750 = vmatprep.subr.mxu0 0.0
    %v1751 = vand.u32 %v69, 4294901760
    %v1752 = vsub.f32 %v69, %v1751
    %v1753 = vand.u32 %v1752, 4294901760
    %v1754 = vsub.f32 %v1752, %v1753
    %v1755 = vand.u32 %v1754, 4294901760
    %1756 = vmatpush1.msra.mxu0 %v1755
    %1757 = vmatprep.subr.mxu0 0.0
    %v1758 = vand.u32 %v68, 4294901760
    %v1759 = vsub.f32 %v68, %v1758
    %v1760 = vand.u32 %v1759, 4294901760
    %v1761 = vsub.f32 %v1759, %v1760
    %v1762 = vand.u32 %v1761, 4294901760
    %1763 = vmatpush1.msra.mxu0 %v1762
    %1764 = vmatprep.subr.mxu0 0.0
    %v1765 = vand.u32 %v67, 4294901760
    %v1766 = vsub.f32 %v67, %v1765
    %v1767 = vand.u32 %v1766, 4294901760
    %v1768 = vsub.f32 %v1766, %v1767
    %v1769 = vand.u32 %v1768, 4294901760
    %1770 = vmatpush1.msra.mxu0 %v1769
    %1771 = vmatprep.subr.mxu0 0.0
    %v1772 = vand.u32 %v66, 4294901760
    %v1773 = vsub.f32 %v66, %v1772
    %v1774 = vand.u32 %v1773, 4294901760
    %v1775 = vsub.f32 %v1773, %v1774
    %v1776 = vand.u32 %v1775, 4294901760
    %1777 = vmatpush1.msra.mxu0 %v1776
    %1778 = vmatprep.subr.mxu0 0.0
    %v1779 = vand.u32 %v65, 4294901760
    %v1780 = vsub.f32 %v65, %v1779
    %v1781 = vand.u32 %v1780, 4294901760
    %v1782 = vsub.f32 %v1780, %v1781
    %v1783 = vand.u32 %v1782, 4294901760
    %1784 = vmatpush1.msra.mxu0 %v1783
    %1785 = vmatprep.subr.mxu0 0.0
    %v1786 = vand.u32 %v64, 4294901760
    %v1787 = vsub.f32 %v64, %v1786
    %v1788 = vand.u32 %v1787, 4294901760
    %v1789 = vsub.f32 %v1787, %v1788
    %v1790 = vand.u32 %v1789, 4294901760
    %1791 = vmatpush1.msra.mxu0 %v1790
    %1792 = vmatprep.subr.mxu0 0.0
    %v1793 = vand.u32 %v63, 4294901760
    %v1794 = vsub.f32 %v63, %v1793
    %v1795 = vand.u32 %v1794, 4294901760
    %v1796 = vsub.f32 %v1794, %v1795
    %v1797 = vand.u32 %v1796, 4294901760
    %1798 = vmatpush1.msra.mxu0 %v1797
    %1799 = vmatprep.subr.mxu0 0.0
    %v1800 = vand.u32 %v62, 4294901760
    %v1801 = vsub.f32 %v62, %v1800
    %v1802 = vand.u32 %v1801, 4294901760
    %v1803 = vsub.f32 %v1801, %v1802
    %v1804 = vand.u32 %v1803, 4294901760
    %1805 = vmatpush1.msra.mxu0 %v1804
    %1806 = vmatprep.subr.mxu0 0.0
    %v1807 = vand.u32 %v61, 4294901760
    %v1808 = vsub.f32 %v61, %v1807
    %v1809 = vand.u32 %v1808, 4294901760
    %v1810 = vsub.f32 %v1808, %v1809
    %v1811 = vand.u32 %v1810, 4294901760
    %1812 = vmatpush1.msra.mxu0 %v1811
    %1813 = vmatprep.subr.mxu0 0.0
    %v1814 = vand.u32 %v60, 4294901760
    %v1815 = vsub.f32 %v60, %v1814
    %v1816 = vand.u32 %v1815, 4294901760
    %v1817 = vsub.f32 %v1815, %v1816
    %v1818 = vand.u32 %v1817, 4294901760
    %1819 = vmatpush1.msra.mxu0 %v1818
    %1820 = vmatprep.subr.mxu0 0.0
    %v1821 = vand.u32 %v59, 4294901760
    %v1822 = vsub.f32 %v59, %v1821
    %v1823 = vand.u32 %v1822, 4294901760
    %v1824 = vsub.f32 %v1822, %v1823
    %v1825 = vand.u32 %v1824, 4294901760
    %1826 = vmatpush1.msra.mxu0 %v1825
    %1827 = vmatprep.subr.mxu0 0.0
    %v1828 = vand.u32 %v58, 4294901760
    %v1829 = vsub.f32 %v58, %v1828
    %v1830 = vand.u32 %v1829, 4294901760
    %v1831 = vsub.f32 %v1829, %v1830
    %v1832 = vand.u32 %v1831, 4294901760
    %1833 = vmatpush1.msra.mxu0 %v1832
    %1834 = vmatprep.subr.mxu0 0.0
    %v1835 = vand.u32 %v89, 4294901760
    %v1836 = vsub.f32 %v89, %v1835
    %v1837 = vand.u32 %v1836, 4294901760
    %v1838 = vsub.f32 %v1836, %v1837
    %v1839 = vand.u32 %v1838, 4294901760
    %1840 = vmatpush2.msra.mxu0 %v1839
    %1841 = vmatprep.subr.mxu0 0.0
    %v1842 = vand.u32 %v88, 4294901760
    %v1843 = vsub.f32 %v88, %v1842
    %v1844 = vand.u32 %v1843, 4294901760
    %v1845 = vsub.f32 %v1843, %v1844
    %v1846 = vand.u32 %v1845, 4294901760
    %1847 = vmatpush2.msra.mxu0 %v1846
    %1848 = vmatprep.subr.mxu0 0.0
    %v1849 = vand.u32 %v87, 4294901760
    %v1850 = vsub.f32 %v87, %v1849
    %v1851 = vand.u32 %v1850, 4294901760
    %v1852 = vsub.f32 %v1850, %v1851
    %v1853 = vand.u32 %v1852, 4294901760
    %1854 = vmatpush2.msra.mxu0 %v1853
    %1855 = vmatprep.subr.mxu0 0.0
    %v1856 = vand.u32 %v86, 4294901760
    %v1857 = vsub.f32 %v86, %v1856
    %v1858 = vand.u32 %v1857, 4294901760
    %v1859 = vsub.f32 %v1857, %v1858
    %v1860 = vand.u32 %v1859, 4294901760
    %1861 = vmatpush2.msra.mxu0 %v1860
    %1862 = vmatprep.subr.mxu0 0.0
    %v1863 = vand.u32 %v85, 4294901760
    %v1864 = vsub.f32 %v85, %v1863
    %v1865 = vand.u32 %v1864, 4294901760
    %v1866 = vsub.f32 %v1864, %v1865
    %v1867 = vand.u32 %v1866, 4294901760
    %1868 = vmatpush2.msra.mxu0 %v1867
    %1869 = vmatprep.subr.mxu0 0.0
    %v1870 = vand.u32 %v84, 4294901760
    %v1871 = vsub.f32 %v84, %v1870
    %v1872 = vand.u32 %v1871, 4294901760
    %v1873 = vsub.f32 %v1871, %v1872
    %v1874 = vand.u32 %v1873, 4294901760
    %1875 = vmatpush2.msra.mxu0 %v1874
    %1876 = vmatprep.subr.mxu0 0.0
    %v1877 = vand.u32 %v83, 4294901760
    %v1878 = vsub.f32 %v83, %v1877
    %v1879 = vand.u32 %v1878, 4294901760
    %v1880 = vsub.f32 %v1878, %v1879
    %v1881 = vand.u32 %v1880, 4294901760
    %1882 = vmatpush2.msra.mxu0 %v1881
    %1883 = vmatprep.subr.mxu0 0.0
    %v1884 = vand.u32 %v82, 4294901760
    %v1885 = vsub.f32 %v82, %v1884
    %v1886 = vand.u32 %v1885, 4294901760
    %v1887 = vsub.f32 %v1885, %v1886
    %v1888 = vand.u32 %v1887, 4294901760
    %1889 = vmatpush2.msra.mxu0 %v1888
    %1890 = vmatprep.subr.mxu0 0.0
    %v1891 = vand.u32 %v81, 4294901760
    %v1892 = vsub.f32 %v81, %v1891
    %v1893 = vand.u32 %v1892, 4294901760
    %v1894 = vsub.f32 %v1892, %v1893
    %v1895 = vand.u32 %v1894, 4294901760
    %1896 = vmatpush2.msra.mxu0 %v1895
    %1897 = vmatprep.subr.mxu0 0.0
    %v1898 = vand.u32 %v80, 4294901760
    %v1899 = vsub.f32 %v80, %v1898
    %v1900 = vand.u32 %v1899, 4294901760
    %v1901 = vsub.f32 %v1899, %v1900
    %v1902 = vand.u32 %v1901, 4294901760
    %1903 = vmatpush2.msra.mxu0 %v1902
    %1904 = vmatprep.subr.mxu0 0.0
    %v1905 = vand.u32 %v79, 4294901760
    %v1906 = vsub.f32 %v79, %v1905
    %v1907 = vand.u32 %v1906, 4294901760
    %v1908 = vsub.f32 %v1906, %v1907
    %v1909 = vand.u32 %v1908, 4294901760
    %1910 = vmatpush2.msra.mxu0 %v1909
    %1911 = vmatprep.subr.mxu0 0.0
    %v1912 = vand.u32 %v78, 4294901760
    %v1913 = vsub.f32 %v78, %v1912
    %v1914 = vand.u32 %v1913, 4294901760
    %v1915 = vsub.f32 %v1913, %v1914
    %v1916 = vand.u32 %v1915, 4294901760
    %1917 = vmatpush2.msra.mxu0 %v1916
    %1918 = vmatprep.subr.mxu0 0.0
    %v1919 = vand.u32 %v77, 4294901760
    %v1920 = vsub.f32 %v77, %v1919
    %v1921 = vand.u32 %v1920, 4294901760
    %v1922 = vsub.f32 %v1920, %v1921
    %v1923 = vand.u32 %v1922, 4294901760
    %1924 = vmatpush2.msra.mxu0 %v1923
    %1925 = vmatprep.subr.mxu0 0.0
    %v1926 = vand.u32 %v76, 4294901760
    %v1927 = vsub.f32 %v76, %v1926
    %v1928 = vand.u32 %v1927, 4294901760
    %v1929 = vsub.f32 %v1927, %v1928
    %v1930 = vand.u32 %v1929, 4294901760
    %1931 = vmatpush2.msra.mxu0 %v1930
    %1932 = vmatprep.subr.mxu0 0.0
    %v1933 = vand.u32 %v75, 4294901760
    %v1934 = vsub.f32 %v75, %v1933
    %v1935 = vand.u32 %v1934, 4294901760
    %v1936 = vsub.f32 %v1934, %v1935
    %v1937 = vand.u32 %v1936, 4294901760
    %1938 = vmatpush2.msra.mxu0 %v1937
    %1939 = vmatprep.subr.mxu0 0.0
    %v1940 = vand.u32 %v74, 4294901760
    %v1941 = vsub.f32 %v74, %v1940
    %v1942 = vand.u32 %v1941, 4294901760
    %v1943 = vsub.f32 %v1941, %v1942
    %v1944 = vand.u32 %v1943, 4294901760
    %1945 = vmatpush2.msra.mxu0 %v1944
    %v1946 = vand.u32 %v25, 4294901760
    %1947 = vmatprep.mubr.f32.mxu0 %v1946
    %v1948 = vand.u32 %v24, 4294901760
    %1949 = vmatmul.mubr.f32.gmra.mxu0 %v1948
    %v1950 = vpop.f32.mrf.mxu0
    %v1951 = vadd.f32 %v1719, %v1950
    %v1952 = vpop.f32.mrf.mxu0
    %1953 = vdwg.mxu0
    %1954 = vmatprep.subr.mxu0 0.0
    %v1955 = vand.u32 %v73, 4294901760
    %v1956 = vsub.f32 %v73, %v1955
    %1957 = vmatpush1.msra.mxu0 %v1956
    %1958 = vmatprep.subr.mxu0 0.0
    %v1959 = vand.u32 %v72, 4294901760
    %v1960 = vsub.f32 %v72, %v1959
    %1961 = vmatpush1.msra.mxu0 %v1960
    %1962 = vmatprep.subr.mxu0 0.0
    %v1963 = vand.u32 %v71, 4294901760
    %v1964 = vsub.f32 %v71, %v1963
    %1965 = vmatpush1.msra.mxu0 %v1964
    %1966 = vmatprep.subr.mxu0 0.0
    %v1967 = vand.u32 %v70, 4294901760
    %v1968 = vsub.f32 %v70, %v1967
    %1969 = vmatpush1.msra.mxu0 %v1968
    %1970 = vmatprep.subr.mxu0 0.0
    %v1971 = vand.u32 %v69, 4294901760
    %v1972 = vsub.f32 %v69, %v1971
    %1973 = vmatpush1.msra.mxu0 %v1972
    %1974 = vmatprep.subr.mxu0 0.0
    %v1975 = vand.u32 %v68, 4294901760
    %v1976 = vsub.f32 %v68, %v1975
    %1977 = vmatpush1.msra.mxu0 %v1976
    %1978 = vmatprep.subr.mxu0 0.0
    %v1979 = vand.u32 %v67, 4294901760
    %v1980 = vsub.f32 %v67, %v1979
    %1981 = vmatpush1.msra.mxu0 %v1980
    %1982 = vmatprep.subr.mxu0 0.0
    %v1983 = vand.u32 %v66, 4294901760
    %v1984 = vsub.f32 %v66, %v1983
    %1985 = vmatpush1.msra.mxu0 %v1984
    %1986 = vmatprep.subr.mxu0 0.0
    %v1987 = vand.u32 %v65, 4294901760
    %v1988 = vsub.f32 %v65, %v1987
    %1989 = vmatpush1.msra.mxu0 %v1988
    %1990 = vmatprep.subr.mxu0 0.0
    %v1991 = vand.u32 %v64, 4294901760
    %v1992 = vsub.f32 %v64, %v1991
    %1993 = vmatpush1.msra.mxu0 %v1992
    %1994 = vmatprep.subr.mxu0 0.0
    %v1995 = vand.u32 %v63, 4294901760
    %v1996 = vsub.f32 %v63, %v1995
    %1997 = vmatpush1.msra.mxu0 %v1996
    %1998 = vmatprep.subr.mxu0 0.0
    %v1999 = vand.u32 %v62, 4294901760
    %v2000 = vsub.f32 %v62, %v1999
    %2001 = vmatpush1.msra.mxu0 %v2000
    %2002 = vmatprep.subr.mxu0 0.0
    %v2003 = vand.u32 %v61, 4294901760
    %v2004 = vsub.f32 %v61, %v2003
    %2005 = vmatpush1.msra.mxu0 %v2004
    %2006 = vmatprep.subr.mxu0 0.0
    %v2007 = vand.u32 %v60, 4294901760
    %v2008 = vsub.f32 %v60, %v2007
    %2009 = vmatpush1.msra.mxu0 %v2008
    %2010 = vmatprep.subr.mxu0 0.0
    %v2011 = vand.u32 %v59, 4294901760
    %v2012 = vsub.f32 %v59, %v2011
    %2013 = vmatpush1.msra.mxu0 %v2012
    %2014 = vmatprep.subr.mxu0 0.0
    %v2015 = vand.u32 %v58, 4294901760
    %v2016 = vsub.f32 %v58, %v2015
    %2017 = vmatpush1.msra.mxu0 %v2016
    %2018 = vmatprep.subr.mxu0 0.0
    %v2019 = vand.u32 %v89, 4294901760
    %v2020 = vsub.f32 %v89, %v2019
    %2021 = vmatpush2.msra.mxu0 %v2020
    %2022 = vmatprep.subr.mxu0 0.0
    %v2023 = vand.u32 %v88, 4294901760
    %v2024 = vsub.f32 %v88, %v2023
    %2025 = vmatpush2.msra.mxu0 %v2024
    %2026 = vmatprep.subr.mxu0 0.0
    %v2027 = vand.u32 %v87, 4294901760
    %v2028 = vsub.f32 %v87, %v2027
    %2029 = vmatpush2.msra.mxu0 %v2028
    %2030 = vmatprep.subr.mxu0 0.0
    %v2031 = vand.u32 %v86, 4294901760
    %v2032 = vsub.f32 %v86, %v2031
    %2033 = vmatpush2.msra.mxu0 %v2032
    %2034 = vmatprep.subr.mxu0 0.0
    %v2035 = vand.u32 %v85, 4294901760
    %v2036 = vsub.f32 %v85, %v2035
    %2037 = vmatpush2.msra.mxu0 %v2036
    %2038 = vmatprep.subr.mxu0 0.0
    %v2039 = vand.u32 %v84, 4294901760
    %v2040 = vsub.f32 %v84, %v2039
    %2041 = vmatpush2.msra.mxu0 %v2040
    %2042 = vmatprep.subr.mxu0 0.0
    %v2043 = vand.u32 %v83, 4294901760
    %v2044 = vsub.f32 %v83, %v2043
    %2045 = vmatpush2.msra.mxu0 %v2044
    %2046 = vmatprep.subr.mxu0 0.0
    %v2047 = vand.u32 %v82, 4294901760
    %v2048 = vsub.f32 %v82, %v2047
    %2049 = vmatpush2.msra.mxu0 %v2048
    %2050 = vmatprep.subr.mxu0 0.0
    %v2051 = vand.u32 %v81, 4294901760
    %v2052 = vsub.f32 %v81, %v2051
    %2053 = vmatpush2.msra.mxu0 %v2052
    %2054 = vmatprep.subr.mxu0 0.0
    %v2055 = vand.u32 %v80, 4294901760
    %v2056 = vsub.f32 %v80, %v2055
    %2057 = vmatpush2.msra.mxu0 %v2056
    %2058 = vmatprep.subr.mxu0 0.0
    %v2059 = vand.u32 %v79, 4294901760
    %v2060 = vsub.f32 %v79, %v2059
    %2061 = vmatpush2.msra.mxu0 %v2060
    %2062 = vmatprep.subr.mxu0 0.0
    %v2063 = vand.u32 %v78, 4294901760
    %v2064 = vsub.f32 %v78, %v2063
    %2065 = vmatpush2.msra.mxu0 %v2064
    %2066 = vmatprep.subr.mxu0 0.0
    %v2067 = vand.u32 %v77, 4294901760
    %v2068 = vsub.f32 %v77, %v2067
    %2069 = vmatpush2.msra.mxu0 %v2068
    %2070 = vmatprep.subr.mxu0 0.0
    %v2071 = vand.u32 %v76, 4294901760
    %v2072 = vsub.f32 %v76, %v2071
    %2073 = vmatpush2.msra.mxu0 %v2072
    %2074 = vmatprep.subr.mxu0 0.0
    %v2075 = vand.u32 %v75, 4294901760
    %v2076 = vsub.f32 %v75, %v2075
    %2077 = vmatpush2.msra.mxu0 %v2076
    %2078 = vmatprep.subr.mxu0 0.0
    %v2079 = vand.u32 %v74, 4294901760
    %v2080 = vsub.f32 %v74, %v2079
    %2081 = vmatpush2.msra.mxu0 %v2080
    %v2082 = vand.u32 %v25, 4294901760
    %v2083 = vsub.f32 %v25, %v2082
    %2084 = vmatprep.mubr.f32.mxu0 %v2083
    %v2085 = vand.u32 %v24, 4294901760
    %v2086 = vsub.f32 %v24, %v2085
    %2087 = vmatmul.mubr.f32.gmra.mxu0 %v2086
    %v2088 = vpop.f32.mrf.mxu0
    %v2089 = vadd.f32 %v1951, %v2088
    %v2090 = vpop.f32.mrf.mxu0
    %2091 = vdwg.mxu0
    %2092 = vmatprep.subr.mxu0 0.0
    %v2093 = vand.u32 %v73, 4294901760
    %2094 = vmatpush1.msra.mxu0 %v2093
    %2095 = vmatprep.subr.mxu0 0.0
    %v2096 = vand.u32 %v72, 4294901760
    %2097 = vmatpush1.msra.mxu0 %v2096
    %2098 = vmatprep.subr.mxu0 0.0
    %v2099 = vand.u32 %v71, 4294901760
    %2100 = vmatpush1.msra.mxu0 %v2099
    %2101 = vmatprep.subr.mxu0 0.0
    %v2102 = vand.u32 %v70, 4294901760
    %2103 = vmatpush1.msra.mxu0 %v2102
    %2104 = vmatprep.subr.mxu0 0.0
    %v2105 = vand.u32 %v69, 4294901760
    %2106 = vmatpush1.msra.mxu0 %v2105
    %2107 = vmatprep.subr.mxu0 0.0
    %v2108 = vand.u32 %v68, 4294901760
    %2109 = vmatpush1.msra.mxu0 %v2108
    %2110 = vmatprep.subr.mxu0 0.0
    %v2111 = vand.u32 %v67, 4294901760
    %2112 = vmatpush1.msra.mxu0 %v2111
    %2113 = vmatprep.subr.mxu0 0.0
    %v2114 = vand.u32 %v66, 4294901760
    %2115 = vmatpush1.msra.mxu0 %v2114
    %2116 = vmatprep.subr.mxu0 0.0
    %v2117 = vand.u32 %v65, 4294901760
    %2118 = vmatpush1.msra.mxu0 %v2117
    %2119 = vmatprep.subr.mxu0 0.0
    %v2120 = vand.u32 %v64, 4294901760
    %2121 = vmatpush1.msra.mxu0 %v2120
    %2122 = vmatprep.subr.mxu0 0.0
    %v2123 = vand.u32 %v63, 4294901760
    %2124 = vmatpush1.msra.mxu0 %v2123
    %2125 = vmatprep.subr.mxu0 0.0
    %v2126 = vand.u32 %v62, 4294901760
    %2127 = vmatpush1.msra.mxu0 %v2126
    %2128 = vmatprep.subr.mxu0 0.0
    %v2129 = vand.u32 %v61, 4294901760
    %2130 = vmatpush1.msra.mxu0 %v2129
    %2131 = vmatprep.subr.mxu0 0.0
    %v2132 = vand.u32 %v60, 4294901760
    %2133 = vmatpush1.msra.mxu0 %v2132
    %2134 = vmatprep.subr.mxu0 0.0
    %v2135 = vand.u32 %v59, 4294901760
    %2136 = vmatpush1.msra.mxu0 %v2135
    %2137 = vmatprep.subr.mxu0 0.0
    %v2138 = vand.u32 %v58, 4294901760
    %2139 = vmatpush1.msra.mxu0 %v2138
    %2140 = vmatprep.subr.mxu0 0.0
    %v2141 = vand.u32 %v89, 4294901760
    %2142 = vmatpush2.msra.mxu0 %v2141
    %2143 = vmatprep.subr.mxu0 0.0
    %v2144 = vand.u32 %v88, 4294901760
    %2145 = vmatpush2.msra.mxu0 %v2144
    %2146 = vmatprep.subr.mxu0 0.0
    %v2147 = vand.u32 %v87, 4294901760
    %2148 = vmatpush2.msra.mxu0 %v2147
    %2149 = vmatprep.subr.mxu0 0.0
    %v2150 = vand.u32 %v86, 4294901760
    %2151 = vmatpush2.msra.mxu0 %v2150
    %2152 = vmatprep.subr.mxu0 0.0
    %v2153 = vand.u32 %v85, 4294901760
    %2154 = vmatpush2.msra.mxu0 %v2153
    %2155 = vmatprep.subr.mxu0 0.0
    %v2156 = vand.u32 %v84, 4294901760
    %2157 = vmatpush2.msra.mxu0 %v2156
    %2158 = vmatprep.subr.mxu0 0.0
    %v2159 = vand.u32 %v83, 4294901760
    %2160 = vmatpush2.msra.mxu0 %v2159
    %2161 = vmatprep.subr.mxu0 0.0
    %v2162 = vand.u32 %v82, 4294901760
    %2163 = vmatpush2.msra.mxu0 %v2162
    %2164 = vmatprep.subr.mxu0 0.0
    %v2165 = vand.u32 %v81, 4294901760
    %2166 = vmatpush2.msra.mxu0 %v2165
    %2167 = vmatprep.subr.mxu0 0.0
    %v2168 = vand.u32 %v80, 4294901760
    %2169 = vmatpush2.msra.mxu0 %v2168
    %2170 = vmatprep.subr.mxu0 0.0
    %v2171 = vand.u32 %v79, 4294901760
    %2172 = vmatpush2.msra.mxu0 %v2171
    %2173 = vmatprep.subr.mxu0 0.0
    %v2174 = vand.u32 %v78, 4294901760
    %2175 = vmatpush2.msra.mxu0 %v2174
    %2176 = vmatprep.subr.mxu0 0.0
    %v2177 = vand.u32 %v77, 4294901760
    %2178 = vmatpush2.msra.mxu0 %v2177
    %2179 = vmatprep.subr.mxu0 0.0
    %v2180 = vand.u32 %v76, 4294901760
    %2181 = vmatpush2.msra.mxu0 %v2180
    %2182 = vmatprep.subr.mxu0 0.0
    %v2183 = vand.u32 %v75, 4294901760
    %2184 = vmatpush2.msra.mxu0 %v2183
    %2185 = vmatprep.subr.mxu0 0.0
    %v2186 = vand.u32 %v74, 4294901760
    %2187 = vmatpush2.msra.mxu0 %v2186
    %v2188 = vand.u32 %v25, 4294901760
    %v2189 = vsub.f32 %v25, %v2188
    %v2190 = vand.u32 %v2189, 4294901760
    %2191 = vmatprep.mubr.f32.mxu0 %v2190
    %v2192 = vand.u32 %v24, 4294901760
    %v2193 = vsub.f32 %v24, %v2192
    %v2194 = vand.u32 %v2193, 4294901760
    %2195 = vmatmul.mubr.f32.gmra.mxu0 %v2194
    %v2196 = vpop.f32.mrf.mxu0
    %v2197 = vadd.f32 %v2089, %v2196
    %v2198 = vpop.f32.mrf.mxu0
    %2199 = vdwg.mxu0
    %2200 = vmatprep.subr.mxu0 0.0
    %v2201 = vand.u32 %v73, 4294901760
    %v2202 = vsub.f32 %v73, %v2201
    %v2203 = vand.u32 %v2202, 4294901760
    %2204 = vmatpush1.msra.mxu0 %v2203
    %2205 = vmatprep.subr.mxu0 0.0
    %v2206 = vand.u32 %v72, 4294901760
    %v2207 = vsub.f32 %v72, %v2206
    %v2208 = vand.u32 %v2207, 4294901760
    %2209 = vmatpush1.msra.mxu0 %v2208
    %2210 = vmatprep.subr.mxu0 0.0
    %v2211 = vand.u32 %v71, 4294901760
    %v2212 = vsub.f32 %v71, %v2211
    %v2213 = vand.u32 %v2212, 4294901760
    %2214 = vmatpush1.msra.mxu0 %v2213
    %2215 = vmatprep.subr.mxu0 0.0
    %v2216 = vand.u32 %v70, 4294901760
    %v2217 = vsub.f32 %v70, %v2216
    %v2218 = vand.u32 %v2217, 4294901760
    %2219 = vmatpush1.msra.mxu0 %v2218
    %2220 = vmatprep.subr.mxu0 0.0
    %v2221 = vand.u32 %v69, 4294901760
    %v2222 = vsub.f32 %v69, %v2221
    %v2223 = vand.u32 %v2222, 4294901760
    %2224 = vmatpush1.msra.mxu0 %v2223
    %2225 = vmatprep.subr.mxu0 0.0
    %v2226 = vand.u32 %v68, 4294901760
    %v2227 = vsub.f32 %v68, %v2226
    %v2228 = vand.u32 %v2227, 4294901760
    %2229 = vmatpush1.msra.mxu0 %v2228
    %2230 = vmatprep.subr.mxu0 0.0
    %v2231 = vand.u32 %v67, 4294901760
    %v2232 = vsub.f32 %v67, %v2231
    %v2233 = vand.u32 %v2232, 4294901760
    %2234 = vmatpush1.msra.mxu0 %v2233
    %2235 = vmatprep.subr.mxu0 0.0
    %v2236 = vand.u32 %v66, 4294901760
    %v2237 = vsub.f32 %v66, %v2236
    %v2238 = vand.u32 %v2237, 4294901760
    %2239 = vmatpush1.msra.mxu0 %v2238
    %2240 = vmatprep.subr.mxu0 0.0
    %v2241 = vand.u32 %v65, 4294901760
    %v2242 = vsub.f32 %v65, %v2241
    %v2243 = vand.u32 %v2242, 4294901760
    %2244 = vmatpush1.msra.mxu0 %v2243
    %2245 = vmatprep.subr.mxu0 0.0
    %v2246 = vand.u32 %v64, 4294901760
    %v2247 = vsub.f32 %v64, %v2246
    %v2248 = vand.u32 %v2247, 4294901760
    %2249 = vmatpush1.msra.mxu0 %v2248
    %2250 = vmatprep.subr.mxu0 0.0
    %v2251 = vand.u32 %v63, 4294901760
    %v2252 = vsub.f32 %v63, %v2251
    %v2253 = vand.u32 %v2252, 4294901760
    %2254 = vmatpush1.msra.mxu0 %v2253
    %2255 = vmatprep.subr.mxu0 0.0
    %v2256 = vand.u32 %v62, 4294901760
    %v2257 = vsub.f32 %v62, %v2256
    %v2258 = vand.u32 %v2257, 4294901760
    %2259 = vmatpush1.msra.mxu0 %v2258
    %2260 = vmatprep.subr.mxu0 0.0
    %v2261 = vand.u32 %v61, 4294901760
    %v2262 = vsub.f32 %v61, %v2261
    %v2263 = vand.u32 %v2262, 4294901760
    %2264 = vmatpush1.msra.mxu0 %v2263
    %2265 = vmatprep.subr.mxu0 0.0
    %v2266 = vand.u32 %v60, 4294901760
    %v2267 = vsub.f32 %v60, %v2266
    %v2268 = vand.u32 %v2267, 4294901760
    %2269 = vmatpush1.msra.mxu0 %v2268
    %2270 = vmatprep.subr.mxu0 0.0
    %v2271 = vand.u32 %v59, 4294901760
    %v2272 = vsub.f32 %v59, %v2271
    %v2273 = vand.u32 %v2272, 4294901760
    %2274 = vmatpush1.msra.mxu0 %v2273
    %2275 = vmatprep.subr.mxu0 0.0
    %v2276 = vand.u32 %v58, 4294901760
    %v2277 = vsub.f32 %v58, %v2276
    %v2278 = vand.u32 %v2277, 4294901760
    %2279 = vmatpush1.msra.mxu0 %v2278
    %2280 = vmatprep.subr.mxu0 0.0
    %v2281 = vand.u32 %v89, 4294901760
    %v2282 = vsub.f32 %v89, %v2281
    %v2283 = vand.u32 %v2282, 4294901760
    %2284 = vmatpush2.msra.mxu0 %v2283
    %2285 = vmatprep.subr.mxu0 0.0
    %v2286 = vand.u32 %v88, 4294901760
    %v2287 = vsub.f32 %v88, %v2286
    %v2288 = vand.u32 %v2287, 4294901760
    %2289 = vmatpush2.msra.mxu0 %v2288
    %2290 = vmatprep.subr.mxu0 0.0
    %v2291 = vand.u32 %v87, 4294901760
    %v2292 = vsub.f32 %v87, %v2291
    %v2293 = vand.u32 %v2292, 4294901760
    %2294 = vmatpush2.msra.mxu0 %v2293
    %2295 = vmatprep.subr.mxu0 0.0
    %v2296 = vand.u32 %v86, 4294901760
    %v2297 = vsub.f32 %v86, %v2296
    %v2298 = vand.u32 %v2297, 4294901760
    %2299 = vmatpush2.msra.mxu0 %v2298
    %2300 = vmatprep.subr.mxu0 0.0
    %v2301 = vand.u32 %v85, 4294901760
    %v2302 = vsub.f32 %v85, %v2301
    %v2303 = vand.u32 %v2302, 4294901760
    %2304 = vmatpush2.msra.mxu0 %v2303
    %2305 = vmatprep.subr.mxu0 0.0
    %v2306 = vand.u32 %v84, 4294901760
    %v2307 = vsub.f32 %v84, %v2306
    %v2308 = vand.u32 %v2307, 4294901760
    %2309 = vmatpush2.msra.mxu0 %v2308
    %2310 = vmatprep.subr.mxu0 0.0
    %v2311 = vand.u32 %v83, 4294901760
    %v2312 = vsub.f32 %v83, %v2311
    %v2313 = vand.u32 %v2312, 4294901760
    %2314 = vmatpush2.msra.mxu0 %v2313
    %2315 = vmatprep.subr.mxu0 0.0
    %v2316 = vand.u32 %v82, 4294901760
    %v2317 = vsub.f32 %v82, %v2316
    %v2318 = vand.u32 %v2317, 4294901760
    %2319 = vmatpush2.msra.mxu0 %v2318
    %2320 = vmatprep.subr.mxu0 0.0
    %v2321 = vand.u32 %v81, 4294901760
    %v2322 = vsub.f32 %v81, %v2321
    %v2323 = vand.u32 %v2322, 4294901760
    %2324 = vmatpush2.msra.mxu0 %v2323
    %2325 = vmatprep.subr.mxu0 0.0
    %v2326 = vand.u32 %v80, 4294901760
    %v2327 = vsub.f32 %v80, %v2326
    %v2328 = vand.u32 %v2327, 4294901760
    %2329 = vmatpush2.msra.mxu0 %v2328
    %2330 = vmatprep.subr.mxu0 0.0
    %v2331 = vand.u32 %v79, 4294901760
    %v2332 = vsub.f32 %v79, %v2331
    %v2333 = vand.u32 %v2332, 4294901760
    %2334 = vmatpush2.msra.mxu0 %v2333
    %2335 = vmatprep.subr.mxu0 0.0
    %v2336 = vand.u32 %v78, 4294901760
    %v2337 = vsub.f32 %v78, %v2336
    %v2338 = vand.u32 %v2337, 4294901760
    %2339 = vmatpush2.msra.mxu0 %v2338
    %2340 = vmatprep.subr.mxu0 0.0
    %v2341 = vand.u32 %v77, 4294901760
    %v2342 = vsub.f32 %v77, %v2341
    %v2343 = vand.u32 %v2342, 4294901760
    %2344 = vmatpush2.msra.mxu0 %v2343
    %2345 = vmatprep.subr.mxu0 0.0
    %v2346 = vand.u32 %v76, 4294901760
    %v2347 = vsub.f32 %v76, %v2346
    %v2348 = vand.u32 %v2347, 4294901760
    %2349 = vmatpush2.msra.mxu0 %v2348
    %2350 = vmatprep.subr.mxu0 0.0
    %v2351 = vand.u32 %v75, 4294901760
    %v2352 = vsub.f32 %v75, %v2351
    %v2353 = vand.u32 %v2352, 4294901760
    %2354 = vmatpush2.msra.mxu0 %v2353
    %2355 = vmatprep.subr.mxu0 0.0
    %v2356 = vand.u32 %v74, 4294901760
    %v2357 = vsub.f32 %v74, %v2356
    %v2358 = vand.u32 %v2357, 4294901760
    %2359 = vmatpush2.msra.mxu0 %v2358
    %v2360 = vand.u32 %v25, 4294901760
    %2361 = vmatprep.mubr.f32.mxu0 %v2360
    %v2362 = vand.u32 %v24, 4294901760
    %2363 = vmatmul.mubr.f32.gmra.mxu0 %v2362
    %v2364 = vpop.f32.mrf.mxu0
    %v2365 = vadd.f32 %v2197, %v2364
    %v2366 = vpop.f32.mrf.mxu0
    %2367 = vdwg.mxu0
    %2368 = vmatprep.subr.mxu0 0.0
    %v2369 = vand.u32 %v73, 4294901760
    %2370 = vmatpush1.msra.mxu0 %v2369
    %2371 = vmatprep.subr.mxu0 0.0
    %v2372 = vand.u32 %v72, 4294901760
    %2373 = vmatpush1.msra.mxu0 %v2372
    %2374 = vmatprep.subr.mxu0 0.0
    %v2375 = vand.u32 %v71, 4294901760
    %2376 = vmatpush1.msra.mxu0 %v2375
    %2377 = vmatprep.subr.mxu0 0.0
    %v2378 = vand.u32 %v70, 4294901760
    %2379 = vmatpush1.msra.mxu0 %v2378
    %2380 = vmatprep.subr.mxu0 0.0
    %v2381 = vand.u32 %v69, 4294901760
    %2382 = vmatpush1.msra.mxu0 %v2381
    %2383 = vmatprep.subr.mxu0 0.0
    %v2384 = vand.u32 %v68, 4294901760
    %2385 = vmatpush1.msra.mxu0 %v2384
    %2386 = vmatprep.subr.mxu0 0.0
    %v2387 = vand.u32 %v67, 4294901760
    %2388 = vmatpush1.msra.mxu0 %v2387
    %2389 = vmatprep.subr.mxu0 0.0
    %v2390 = vand.u32 %v66, 4294901760
    %2391 = vmatpush1.msra.mxu0 %v2390
    %2392 = vmatprep.subr.mxu0 0.0
    %v2393 = vand.u32 %v65, 4294901760
    %2394 = vmatpush1.msra.mxu0 %v2393
    %2395 = vmatprep.subr.mxu0 0.0
    %v2396 = vand.u32 %v64, 4294901760
    %2397 = vmatpush1.msra.mxu0 %v2396
    %2398 = vmatprep.subr.mxu0 0.0
    %v2399 = vand.u32 %v63, 4294901760
    %2400 = vmatpush1.msra.mxu0 %v2399
    %2401 = vmatprep.subr.mxu0 0.0
    %v2402 = vand.u32 %v62, 4294901760
    %2403 = vmatpush1.msra.mxu0 %v2402
    %2404 = vmatprep.subr.mxu0 0.0
    %v2405 = vand.u32 %v61, 4294901760
    %2406 = vmatpush1.msra.mxu0 %v2405
    %2407 = vmatprep.subr.mxu0 0.0
    %v2408 = vand.u32 %v60, 4294901760
    %2409 = vmatpush1.msra.mxu0 %v2408
    %2410 = vmatprep.subr.mxu0 0.0
    %v2411 = vand.u32 %v59, 4294901760
    %2412 = vmatpush1.msra.mxu0 %v2411
    %2413 = vmatprep.subr.mxu0 0.0
    %v2414 = vand.u32 %v58, 4294901760
    %2415 = vmatpush1.msra.mxu0 %v2414
    %2416 = vmatprep.subr.mxu0 0.0
    %v2417 = vand.u32 %v89, 4294901760
    %2418 = vmatpush2.msra.mxu0 %v2417
    %2419 = vmatprep.subr.mxu0 0.0
    %v2420 = vand.u32 %v88, 4294901760
    %2421 = vmatpush2.msra.mxu0 %v2420
    %2422 = vmatprep.subr.mxu0 0.0
    %v2423 = vand.u32 %v87, 4294901760
    %2424 = vmatpush2.msra.mxu0 %v2423
    %2425 = vmatprep.subr.mxu0 0.0
    %v2426 = vand.u32 %v86, 4294901760
    %2427 = vmatpush2.msra.mxu0 %v2426
    %2428 = vmatprep.subr.mxu0 0.0
    %v2429 = vand.u32 %v85, 4294901760
    %2430 = vmatpush2.msra.mxu0 %v2429
    %2431 = vmatprep.subr.mxu0 0.0
    %v2432 = vand.u32 %v84, 4294901760
    %2433 = vmatpush2.msra.mxu0 %v2432
    %2434 = vmatprep.subr.mxu0 0.0
    %v2435 = vand.u32 %v83, 4294901760
    %2436 = vmatpush2.msra.mxu0 %v2435
    %2437 = vmatprep.subr.mxu0 0.0
    %v2438 = vand.u32 %v82, 4294901760
    %2439 = vmatpush2.msra.mxu0 %v2438
    %2440 = vmatprep.subr.mxu0 0.0
    %v2441 = vand.u32 %v81, 4294901760
    %2442 = vmatpush2.msra.mxu0 %v2441
    %2443 = vmatprep.subr.mxu0 0.0
    %v2444 = vand.u32 %v80, 4294901760
    %2445 = vmatpush2.msra.mxu0 %v2444
    %2446 = vmatprep.subr.mxu0 0.0
    %v2447 = vand.u32 %v79, 4294901760
    %2448 = vmatpush2.msra.mxu0 %v2447
    %2449 = vmatprep.subr.mxu0 0.0
    %v2450 = vand.u32 %v78, 4294901760
    %2451 = vmatpush2.msra.mxu0 %v2450
    %2452 = vmatprep.subr.mxu0 0.0
    %v2453 = vand.u32 %v77, 4294901760
    %2454 = vmatpush2.msra.mxu0 %v2453
    %2455 = vmatprep.subr.mxu0 0.0
    %v2456 = vand.u32 %v76, 4294901760
    %2457 = vmatpush2.msra.mxu0 %v2456
    %2458 = vmatprep.subr.mxu0 0.0
    %v2459 = vand.u32 %v75, 4294901760
    %2460 = vmatpush2.msra.mxu0 %v2459
    %2461 = vmatprep.subr.mxu0 0.0
    %v2462 = vand.u32 %v74, 4294901760
    %2463 = vmatpush2.msra.mxu0 %v2462
    %v2464 = vand.u32 %v25, 4294901760
    %2465 = vmatprep.mubr.f32.mxu0 %v2464
    %v2466 = vand.u32 %v24, 4294901760
    %2467 = vmatmul.mubr.f32.gmra.mxu0 %v2466
    %v2468 = vpop.f32.mrf.mxu0
    %v2469 = vadd.f32 %v2365, %v2468
    %v2470 = vpop.f32.mrf.mxu0
    %2471 = vdwg.mxu0
    %s2472 = sld [smem:[#allocation2]]
    %v2473 = vstv %s2472
    %v2474 = vadd.f32 %v2469, %v2473
    %vm2475 = vcmask 130048
    %2476 = vst.msk [vmem:[#allocation3] sm:$0xff] %vm2475, %v2474
    // Predicated region
    $region22: #{tpu_custom_call.1} parent=1 // pred_check
      _
    $region23: #{tpu_custom_call.1} parent=1 // pred_check_branch
      %2478 = sbr.rel (0) target = $region25
    $region24: #{tpu_custom_call.1} parent=1 // pred_region
      %s2480 = ssub.s32 128, 128
      %2481 = vsyncadd [#allocation4], %s2480
      %s2483 = sshll.u32 [#allocation3], 4
      %s2484 = int_to_ptr.vmem [resolvable:$true] %s2483
      %2486 = dma.vmem_to_hbm [thread:$0]  %s2484, 128, %s5, [#allocation4]
    $region25: #{tpu_custom_call.1} parent=1 // pred_fallthru
      _
    // Predicated region
    $region26: #{tpu_custom_call.1} parent=1 // pred_check
      _
    $region27: #{tpu_custom_call.1} parent=1 // pred_check_branch
      %2488 = sbr.rel (0) target = $region29
    $region28: #{tpu_custom_call.1} parent=1 // pred_region
      %2489 = dma.done [#allocation4], 128
    $region29: #{tpu_custom_call.1} parent=1 // pred_fallthru
      _
    %2490 = vsyncpa [#allocation4], 1

</llo_original>
